<compile_context>
chip_gen: v7x
topology: tpu7x:2x2x1
jax: 0.10.0
libtpu: 0.0.40
codegen_flags: <defaults>
</compile_context>

<pallas_src>
import functools

import numpy as np
import jax
import jax.numpy as jnp
from jax import lax
from jax.experimental import pallas as pl
from jax.experimental.pallas import tpu as pltpu


# ----------------------------------------------------------------------------
# Config (stands in for `cfg` of the PyTorch module) — deterministic, in-script.
# ----------------------------------------------------------------------------
DIST_LOSS_WEIGHT = 0.1
KERNEL_BLUR = 5          # cfg.pixel_dist_kernel_blur
SIGMA = 2.0              # cfg.pixel_dist_sigma
CUT_SIZE = 16            # cfg.cut_size

# TODO(synk): for the scaled-up configuration use bf16 inputs + f32 accumulation
# (halves HBM traffic, fewer MXU passes) per the perf review; HIGHEST is kept here
# because it is free at this size and guarantees the f32-reference self-check.
_MXU_PRECISION = jax.lax.Precision.HIGHEST


def gaussian_kernel1d(kernel_size, sigma):
    """Same construction as torchvision.transforms.functional.gaussian_blur."""
    ksize_half = (kernel_size - 1) * 0.5
    x = np.linspace(-ksize_half, ksize_half, kernel_size)
    pdf = np.exp(-0.5 * (x / sigma) ** 2)
    return (pdf / pdf.sum()).astype(np.float32)


_TAPS = tuple(float(v) for v in gaussian_kernel1d(KERNEL_BLUR, SIGMA))


def get_scheduler(dist_loss_weight, step=None):
    # Host-side scalar math, exactly as in the PyTorch module.
    if step is not None:
        return float(dist_loss_weight * np.exp(-0.5 * ((step - 300) / 20) ** 2))
    return float(dist_loss_weight)


# ----------------------------------------------------------------------------
# Reflect-padded separable blur as banded operators, rebuilt from 2-D iota at
# trace time (usable both inside the Pallas kernel and in the plain-JAX VJP).
#   vertical:   blur_v = Av @ x        Av: (H, H)
#   horizontal: blur_h = x  @ B        B : (NC*W, NC*W), block-diagonal per plane
# Reflect padding ('reflect', edge not repeated) is folded into the operators.
# ----------------------------------------------------------------------------
def _reflect(idx, n):
    idx = jnp.where(idx < 0, -idx, idx)
    return jnp.where(idx > n - 1, 2 * (n - 1) - idx, idx)


def _vertical_operator(h, taps, pad):
    r = lax.broadcasted_iota(jnp.int32, (h, h), 0)   # output row
    s = lax.broadcasted_iota(jnp.int32, (h, h), 1)   # source row
    a = jnp.zeros((h, h), jnp.float32)
    for k, wk in enumerate(taps):
        src = _reflect(r - pad + k, h)
        a = a + jnp.where(s == src, wk, 0.0)
    return a


def _horizontal_operator(nplanes, w, taps, pad):
    # TODO(synk): for real resolutions do NOT build this O((NC*W)^2) block-diagonal
    # operator; batch planes with a grid axis and a (W, W) operator instead.
    n = nplanes * w
    i = lax.broadcasted_iota(jnp.int32, (n, n), 0)   # source column
    j = lax.broadcasted_iota(jnp.int32, (n, n), 1)   # output column
    b = jnp.zeros((n, n), jnp.float32)
    for p in range(nplanes):
        base = p * w
        j_loc = j - base
        in_plane = (j_loc >= 0) & (j_loc < w)
        for k, wk in enumerate(taps):
            src = _reflect(j_loc - pad + k, w)
            b = b + jnp.where(in_plane & (i == base + src), wk, 0.0)
    return b


# ----------------------------------------------------------------------------
# Pallas kernel: grid-less single invocation; whole (H, NC*W) problem is a few
# vregs. Outputs: MSE scalar (SMEM, written once) + residual diff (VMEM, for VJP).
# ----------------------------------------------------------------------------
@functools.lru_cache(maxsize=None)
def _build_tone_pallas(nplanes, h, w, taps):
    pad = (len(taps) - 1) // 2
    assert pad <= h - 1 and pad <= w - 1, "reflect pad larger than image"
    n_cols = nplanes * w
    inv_count = 1.0 / float(nplanes * h * w)

    def kernel(x_ref, init_ref, mse_ref, diff_ref):
        # Blur operators baked into the kernel: rebuilt in-register from iota and
        # compile-time tap weights (no constant operands, no extra DMAs, no H2D).
        av = _vertical_operator(h, taps, pad)             # (H, H)
        bh = _horizontal_operator(nplanes, w, taps, pad)  # (NC*W, NC*W)
        x = x_ref[...]                                    # (H, NC*W), lane-dense
        # Horizontal blur on the MXU: (H, NC*W) @ (NC*W, NC*W)
        xh = jnp.dot(x, bh, precision=_MXU_PRECISION,
                     preferred_element_type=jnp.float32)
        # Vertical blur on the MXU: (H, H) @ (H, NC*W)
        blur = jnp.dot(av, xh, precision=_MXU_PRECISION,
                       preferred_element_type=jnp.float32)
        d = blur - init_ref[...]
        diff_ref[...] = d                                  # residual for the VJP
        mse_ref[0] = jnp.sum(d * d) * inv_count            # single scalar SMEM store

    # TODO(synk): scale-up — add a row-strip grid axis marked 'parallel'
    # (dual-TC v7x), partial SSE per strip, and set
    # pltpu.CompilerParams(vmem_limit_bytes=...) per generation.
    return pl.pallas_call(
        kernel,
        out_shape=(jax.ShapeDtypeStruct((1,), jnp.float32),
                   jax.ShapeDtypeStruct((h, n_cols), jnp.float32)),
        in_specs=[pl.BlockSpec(memory_space=pltpu.MemorySpace.VMEM),
                  pl.BlockSpec(memory_space=pltpu.MemorySpace.VMEM)],
        out_specs=(pl.BlockSpec(memory_space=pltpu.MemorySpace.SMEM),
                   pl.BlockSpec(memory_space=pltpu.MemorySpace.VMEM)),
    )


def _blur_mse_pallas(nplanes, w, taps, x_wide, init_wide):
    h = x_wide.shape[0]
    mse, diff = _build_tone_pallas(nplanes, h, w, taps)(x_wide, init_wide)
    return mse[0], diff


# ---- custom VJP (pallas_call has no autodiff rule; ToneLoss is used in jax.grad)
@functools.partial(jax.custom_vjp, nondiff_argnums=(0, 1, 2))
def _blur_mse(nplanes, w, taps, x_wide, init_wide):
    mse, _ = _blur_mse_pallas(nplanes, w, taps, x_wide, init_wide)
    return mse


def _blur_mse_fwd(nplanes, w, taps, x_wide, init_wide):
    mse, diff = _blur_mse_pallas(nplanes, w, taps, x_wide, init_wide)
    return mse, diff


def _blur_mse_bwd(nplanes, w, taps, diff, g):
    # d(mse)/dx = 2/count * Av^T @ (blur(x) - init) @ B^T  — two tiny matmuls.
    h = diff.shape[0]
    pad = (len(taps) - 1) // 2
    av = _vertical_operator(h, taps, pad)
    bh = _horizontal_operator(nplanes, w, taps, pad)
    hi = jax.lax.Precision.HIGHEST
    gx = jnp.dot(av.T, jnp.dot(diff, bh.T, precision=hi), precision=hi)
    gx = gx * ((2.0 / diff.size) * g)
    # init_blurred is .detach()-ed in the reference module -> zero cotangent.
    return gx, jnp.zeros_like(diff)


_blur_mse.defvjp(_blur_mse_fwd, _blur_mse_bwd)


# ----------------------------------------------------------------------------
# Jitted forward (layout plumbing + scheduler scale fused around the pallas_call).
# ----------------------------------------------------------------------------
@functools.partial(jax.jit, static_argnames=("taps",))
def _tone_loss_core(cur_raster, init_blurred, scale, *, taps):
    n, c, h, w = cur_raster.shape
    nplanes = n * c

    def to_wide(img):   # (N, C, H, W) -> lane-dense (H, N*C*W)
        return jnp.transpose(img.astype(jnp.float32), (2, 0, 1, 3)).reshape(h, nplanes * w)

    x_wide = to_wide(cur_raster)
    init_wide = lax.stop_gradient(to_wide(init_blurred))   # matches .detach()
    return _blur_mse(nplanes, w, taps, x_wide, init_wide) * scale


def tone_loss_forward(cur_raster, init_blurred, dist_loss_weight=DIST_LOSS_WEIGHT,
                      step=None, taps=_TAPS):
    """ToneLoss.forward: MSE(init_blurred.detach(), blur(cur)) * scheduler(step)."""
    scale = get_scheduler(dist_loss_weight, step)
    return _tone_loss_core(cur_raster, init_blurred, scale,
                           taps=tuple(float(t) for t in taps))


# ----------------------------------------------------------------------------
# Pure-JAX reference blur (set_image_init setup path + self-check).
# ----------------------------------------------------------------------------
def _gaussian_blur_jax(x_nchw, w1d):
    k = w1d.shape[0]
    pad = (k - 1) // 2
    xp = jnp.pad(x_nchw, ((0, 0), (0, 0), (pad, pad), (pad, pad)), mode="reflect")
    n, c, hp, wp = xp.shape
    h, w = hp - k + 1, wp - k + 1
    tmp = sum(w1d[i] * xp[:, :, i:i + h, :] for i in range(k))
    return sum(w1d[i] * tmp[:, :, :, i:i + w] for i in range(k))


# ----------------------------------------------------------------------------
if __name__ == "__main__":
    key = jax.random.PRNGKey(0)
    k_init, k_cur = jax.random.split(key)

    # Module semantics: im_init is (1, 3, cut_size, cut_size) after permute/unsqueeze/resize.
    N, C, H, W = 1, 3, CUT_SIZE, CUT_SIZE
    w1d = jnp.asarray(gaussian_kernel1d(KERNEL_BLUR, SIGMA))

    # set_image_init(): blur the (already roi-cropped / resized) init image.
    # TODO(synk): roi crop + torchvision.Resize from set_image_init are setup glue, done in plain JAX.
    im_init = jax.random.uniform(k_init, (N, C, H, W), dtype=jnp.float32)
    init_blurred = _gaussian_blur_jax(im_init, w1d)

    cur_raster = jax.random.uniform(k_cur, (N, C, H, W), dtype=jnp.float32)

    # Pallas forward (step=None path and scheduled-step path).
    loss = jax.block_until_ready(
        tone_loss_forward(cur_raster, init_blurred, DIST_LOSS_WEIGHT, step=None))
    loss_step = jax.block_until_ready(
        tone_loss_forward(cur_raster, init_blurred, DIST_LOSS_WEIGHT, step=310))

    # Pure-JAX reference checks.
    blurred_cur_ref = _gaussian_blur_jax(cur_raster, w1d)
    ref = jnp.mean((init_blurred - blurred_cur_ref) ** 2) * get_scheduler(DIST_LOSS_WEIGHT, None)
    ref_step = jnp.mean((init_blurred - blurred_cur_ref) ** 2) * get_scheduler(DIST_LOSS_WEIGHT, 310)

    np.testing.assert_allclose(np.asarray(loss), np.asarray(ref), rtol=1e-4, atol=1e-7)
    np.testing.assert_allclose(np.asarray(loss_step), np.asarray(ref_step), rtol=1e-4, atol=1e-7)

    # Gradient path (custom VJP) vs. autodiff of the pure-JAX reference.
    g_kernel = jax.block_until_ready(
        jax.grad(lambda x: tone_loss_forward(x, init_blurred, DIST_LOSS_WEIGHT, step=None))(cur_raster))
    g_ref = jax.grad(
        lambda x: jnp.mean((init_blurred - _gaussian_blur_jax(x, w1d)) ** 2)
        * get_scheduler(DIST_LOSS_WEIGHT, None))(cur_raster)
    np.testing.assert_allclose(np.asarray(g_kernel), np.asarray(g_ref), rtol=1e-3, atol=1e-8)

    print("KERNEL_OK")
</pallas_src>

<mosaic_0001>
module attributes {stable_mosaic.version = 11 : i64} {
  func.func @kernel(%arg0: memref<16x48xf32, #tpu.memory_space<vmem>>, %arg1: memref<16x48xf32, #tpu.memory_space<vmem>>, %arg2: memref<1xf32, #tpu.memory_space<smem>>, %arg3: memref<16x48xf32, #tpu.memory_space<vmem>>) attributes {dimension_semantics = [], scalar_prefetch = 0 : i64, scratch_operands = 0 : i64, tpu.core_type = #tpu.core_type<tc>} {
    %0 = tpu.iota {dimensions = array<i32: 0>} : vector<16x16xi32>
    %1 = tpu.iota {dimensions = array<i32: 1>} : vector<16x16xi32>
    %cst = arith.constant 0.000000e+00 : f32
    %2 = vector.broadcast %cst : f32 to vector<16x16xf32>
    %c2_i32 = arith.constant 2 : i32
    %3 = vector.broadcast %c2_i32 : i32 to vector<16x16xi32>
    %4 = arith.subi %0, %3 : vector<16x16xi32>
    %c0_i32 = arith.constant 0 : i32
    %5 = vector.broadcast %c0_i32 : i32 to vector<16x16xi32>
    %6 = arith.addi %4, %5 : vector<16x16xi32>
    %c0_i32_0 = arith.constant 0 : i32
    %7 = vector.broadcast %c0_i32_0 : i32 to vector<16x16xi32>
    %8 = arith.cmpi slt, %6, %7 : vector<16x16xi32>
    %c0_i32_1 = arith.constant 0 : i32
    %9 = vector.broadcast %c0_i32_1 : i32 to vector<16x16xi32>
    %10 = arith.subi %9, %6 : vector<16x16xi32>
    %11 = arith.select %8, %10, %6 : vector<16x16xi1>, vector<16x16xi32>
    %c15_i32 = arith.constant 15 : i32
    %12 = vector.broadcast %c15_i32 : i32 to vector<16x16xi32>
    %13 = arith.cmpi sgt, %11, %12 : vector<16x16xi32>
    %c30_i32 = arith.constant 30 : i32
    %14 = vector.broadcast %c30_i32 : i32 to vector<16x16xi32>
    %15 = arith.subi %14, %11 : vector<16x16xi32>
    %16 = arith.select %13, %15, %11 : vector<16x16xi1>, vector<16x16xi32>
    %17 = arith.cmpi eq, %1, %16 : vector<16x16xi32>
    %cst_2 = arith.constant 0.152469143 : f32
    %cst_3 = arith.constant 0.000000e+00 : f32
    %18 = vector.broadcast %cst_2 : f32 to vector<16x16xf32>
    %19 = vector.broadcast %cst_3 : f32 to vector<16x16xf32>
    %20 = arith.select %17, %18, %19 : vector<16x16xi1>, vector<16x16xf32>
    %21 = arith.addf %2, %20 : vector<16x16xf32>
    %c2_i32_4 = arith.constant 2 : i32
    %22 = vector.broadcast %c2_i32_4 : i32 to vector<16x16xi32>
    %23 = arith.subi %0, %22 : vector<16x16xi32>
    %c1_i32 = arith.constant 1 : i32
    %24 = vector.broadcast %c1_i32 : i32 to vector<16x16xi32>
    %25 = arith.addi %23, %24 : vector<16x16xi32>
    %c0_i32_5 = arith.constant 0 : i32
    %26 = vector.broadcast %c0_i32_5 : i32 to vector<16x16xi32>
    %27 = arith.cmpi slt, %25, %26 : vector<16x16xi32>
    %c0_i32_6 = arith.constant 0 : i32
    %28 = vector.broadcast %c0_i32_6 : i32 to vector<16x16xi32>
    %29 = arith.subi %28, %25 : vector<16x16xi32>
    %30 = arith.select %27, %29, %25 : vector<16x16xi1>, vector<16x16xi32>
    %c15_i32_7 = arith.constant 15 : i32
    %31 = vector.broadcast %c15_i32_7 : i32 to vector<16x16xi32>
    %32 = arith.cmpi sgt, %30, %31 : vector<16x16xi32>
    %c30_i32_8 = arith.constant 30 : i32
    %33 = vector.broadcast %c30_i32_8 : i32 to vector<16x16xi32>
    %34 = arith.subi %33, %30 : vector<16x16xi32>
    %35 = arith.select %32, %34, %30 : vector<16x16xi1>, vector<16x16xi32>
    %36 = arith.cmpi eq, %1, %35 : vector<16x16xi32>
    %cst_9 = arith.constant 0.221841291 : f32
    %cst_10 = arith.constant 0.000000e+00 : f32
    %37 = vector.broadcast %cst_9 : f32 to vector<16x16xf32>
    %38 = vector.broadcast %cst_10 : f32 to vector<16x16xf32>
    %39 = arith.select %36, %37, %38 : vector<16x16xi1>, vector<16x16xf32>
    %40 = arith.addf %21, %39 : vector<16x16xf32>
    %c2_i32_11 = arith.constant 2 : i32
    %41 = vector.broadcast %c2_i32_11 : i32 to vector<16x16xi32>
    %42 = arith.subi %0, %41 : vector<16x16xi32>
    %c2_i32_12 = arith.constant 2 : i32
    %43 = vector.broadcast %c2_i32_12 : i32 to vector<16x16xi32>
    %44 = arith.addi %42, %43 : vector<16x16xi32>
    %c0_i32_13 = arith.constant 0 : i32
    %45 = vector.broadcast %c0_i32_13 : i32 to vector<16x16xi32>
    %46 = arith.cmpi slt, %44, %45 : vector<16x16xi32>
    %c0_i32_14 = arith.constant 0 : i32
    %47 = vector.broadcast %c0_i32_14 : i32 to vector<16x16xi32>
    %48 = arith.subi %47, %44 : vector<16x16xi32>
    %49 = arith.select %46, %48, %44 : vector<16x16xi1>, vector<16x16xi32>
    %c15_i32_15 = arith.constant 15 : i32
    %50 = vector.broadcast %c15_i32_15 : i32 to vector<16x16xi32>
    %51 = arith.cmpi sgt, %49, %50 : vector<16x16xi32>
    %c30_i32_16 = arith.constant 30 : i32
    %52 = vector.broadcast %c30_i32_16 : i32 to vector<16x16xi32>
    %53 = arith.subi %52, %49 : vector<16x16xi32>
    %54 = arith.select %51, %53, %49 : vector<16x16xi1>, vector<16x16xi32>
    %55 = arith.cmpi eq, %1, %54 : vector<16x16xi32>
    %cst_17 = arith.constant 0.251379132 : f32
    %cst_18 = arith.constant 0.000000e+00 : f32
    %56 = vector.broadcast %cst_17 : f32 to vector<16x16xf32>
    %57 = vector.broadcast %cst_18 : f32 to vector<16x16xf32>
    %58 = arith.select %55, %56, %57 : vector<16x16xi1>, vector<16x16xf32>
    %59 = arith.addf %40, %58 : vector<16x16xf32>
    %c2_i32_19 = arith.constant 2 : i32
    %60 = vector.broadcast %c2_i32_19 : i32 to vector<16x16xi32>
    %61 = arith.subi %0, %60 : vector<16x16xi32>
    %c3_i32 = arith.constant 3 : i32
    %62 = vector.broadcast %c3_i32 : i32 to vector<16x16xi32>
    %63 = arith.addi %61, %62 : vector<16x16xi32>
    %c0_i32_20 = arith.constant 0 : i32
    %64 = vector.broadcast %c0_i32_20 : i32 to vector<16x16xi32>
    %65 = arith.cmpi slt, %63, %64 : vector<16x16xi32>
    %c0_i32_21 = arith.constant 0 : i32
    %66 = vector.broadcast %c0_i32_21 : i32 to vector<16x16xi32>
    %67 = arith.subi %66, %63 : vector<16x16xi32>
    %68 = arith.select %65, %67, %63 : vector<16x16xi1>, vector<16x16xi32>
    %c15_i32_22 = arith.constant 15 : i32
    %69 = vector.broadcast %c15_i32_22 : i32 to vector<16x16xi32>
    %70 = arith.cmpi sgt, %68, %69 : vector<16x16xi32>
    %c30_i32_23 = arith.constant 30 : i32
    %71 = vector.broadcast %c30_i32_23 : i32 to vector<16x16xi32>
    %72 = arith.subi %71, %68 : vector<16x16xi32>
    %73 = arith.select %70, %72, %68 : vector<16x16xi1>, vector<16x16xi32>
    %74 = arith.cmpi eq, %1, %73 : vector<16x16xi32>
    %cst_24 = arith.constant 0.221841291 : f32
    %cst_25 = arith.constant 0.000000e+00 : f32
    %75 = vector.broadcast %cst_24 : f32 to vector<16x16xf32>
    %76 = vector.broadcast %cst_25 : f32 to vector<16x16xf32>
    %77 = arith.select %74, %75, %76 : vector<16x16xi1>, vector<16x16xf32>
    %78 = arith.addf %59, %77 : vector<16x16xf32>
    %c2_i32_26 = arith.constant 2 : i32
    %79 = vector.broadcast %c2_i32_26 : i32 to vector<16x16xi32>
    %80 = arith.subi %0, %79 : vector<16x16xi32>
    %c4_i32 = arith.constant 4 : i32
    %81 = vector.broadcast %c4_i32 : i32 to vector<16x16xi32>
    %82 = arith.addi %80, %81 : vector<16x16xi32>
    %c0_i32_27 = arith.constant 0 : i32
    %83 = vector.broadcast %c0_i32_27 : i32 to vector<16x16xi32>
    %84 = arith.cmpi slt, %82, %83 : vector<16x16xi32>
    %c0_i32_28 = arith.constant 0 : i32
    %85 = vector.broadcast %c0_i32_28 : i32 to vector<16x16xi32>
    %86 = arith.subi %85, %82 : vector<16x16xi32>
    %87 = arith.select %84, %86, %82 : vector<16x16xi1>, vector<16x16xi32>
    %c15_i32_29 = arith.constant 15 : i32
    %88 = vector.broadcast %c15_i32_29 : i32 to vector<16x16xi32>
    %89 = arith.cmpi sgt, %87, %88 : vector<16x16xi32>
    %c30_i32_30 = arith.constant 30 : i32
    %90 = vector.broadcast %c30_i32_30 : i32 to vector<16x16xi32>
    %91 = arith.subi %90, %87 : vector<16x16xi32>
    %92 = arith.select %89, %91, %87 : vector<16x16xi1>, vector<16x16xi32>
    %93 = arith.cmpi eq, %1, %92 : vector<16x16xi32>
    %cst_31 = arith.constant 0.152469143 : f32
    %cst_32 = arith.constant 0.000000e+00 : f32
    %94 = vector.broadcast %cst_31 : f32 to vector<16x16xf32>
    %95 = vector.broadcast %cst_32 : f32 to vector<16x16xf32>
    %96 = arith.select %93, %94, %95 : vector<16x16xi1>, vector<16x16xf32>
    %97 = arith.addf %78, %96 : vector<16x16xf32>
    %98 = tpu.iota {dimensions = array<i32: 0>} : vector<48x48xi32>
    %99 = tpu.iota {dimensions = array<i32: 1>} : vector<48x48xi32>
    %cst_33 = arith.constant 0.000000e+00 : f32
    %100 = vector.broadcast %cst_33 : f32 to vector<48x48xf32>
    %c0_i32_34 = arith.constant 0 : i32
    %101 = vector.broadcast %c0_i32_34 : i32 to vector<48x48xi32>
    %102 = arith.subi %99, %101 : vector<48x48xi32>
    %c0_i32_35 = arith.constant 0 : i32
    %103 = vector.broadcast %c0_i32_35 : i32 to vector<48x48xi32>
    %104 = arith.cmpi sge, %102, %103 : vector<48x48xi32>
    %c16_i32 = arith.constant 16 : i32
    %105 = vector.broadcast %c16_i32 : i32 to vector<48x48xi32>
    %106 = arith.cmpi slt, %102, %105 : vector<48x48xi32>
    %107 = arith.andi %104, %106 : vector<48x48xi1>
    %c2_i32_36 = arith.constant 2 : i32
    %108 = vector.broadcast %c2_i32_36 : i32 to vector<48x48xi32>
    %109 = arith.subi %102, %108 : vector<48x48xi32>
    %c0_i32_37 = arith.constant 0 : i32
    %110 = vector.broadcast %c0_i32_37 : i32 to vector<48x48xi32>
    %111 = arith.addi %109, %110 : vector<48x48xi32>
    %c0_i32_38 = arith.constant 0 : i32
    %112 = vector.broadcast %c0_i32_38 : i32 to vector<48x48xi32>
    %113 = arith.cmpi slt, %111, %112 : vector<48x48xi32>
    %c0_i32_39 = arith.constant 0 : i32
    %114 = vector.broadcast %c0_i32_39 : i32 to vector<48x48xi32>
    %115 = arith.subi %114, %111 : vector<48x48xi32>
    %116 = arith.select %113, %115, %111 : vector<48x48xi1>, vector<48x48xi32>
    %c15_i32_40 = arith.constant 15 : i32
    %117 = vector.broadcast %c15_i32_40 : i32 to vector<48x48xi32>
    %118 = arith.cmpi sgt, %116, %117 : vector<48x48xi32>
    %c30_i32_41 = arith.constant 30 : i32
    %119 = vector.broadcast %c30_i32_41 : i32 to vector<48x48xi32>
    %120 = arith.subi %119, %116 : vector<48x48xi32>
    %121 = arith.select %118, %120, %116 : vector<48x48xi1>, vector<48x48xi32>
    %c0_i32_42 = arith.constant 0 : i32
    %122 = vector.broadcast %c0_i32_42 : i32 to vector<48x48xi32>
    %123 = arith.addi %122, %121 : vector<48x48xi32>
    %124 = arith.cmpi eq, %98, %123 : vector<48x48xi32>
    %125 = arith.andi %107, %124 : vector<48x48xi1>
    %cst_43 = arith.constant 0.152469143 : f32
    %cst_44 = arith.constant 0.000000e+00 : f32
    %126 = vector.broadcast %cst_43 : f32 to vector<48x48xf32>
    %127 = vector.broadcast %cst_44 : f32 to vector<48x48xf32>
    %128 = arith.select %125, %126, %127 : vector<48x48xi1>, vector<48x48xf32>
    %129 = arith.addf %100, %128 : vector<48x48xf32>
    %c2_i32_45 = arith.constant 2 : i32
    %130 = vector.broadcast %c2_i32_45 : i32 to vector<48x48xi32>
    %131 = arith.subi %102, %130 : vector<48x48xi32>
    %c1_i32_46 = arith.constant 1 : i32
    %132 = vector.broadcast %c1_i32_46 : i32 to vector<48x48xi32>
    %133 = arith.addi %131, %132 : vector<48x48xi32>
    %c0_i32_47 = arith.constant 0 : i32
    %134 = vector.broadcast %c0_i32_47 : i32 to vector<48x48xi32>
    %135 = arith.cmpi slt, %133, %134 : vector<48x48xi32>
    %c0_i32_48 = arith.constant 0 : i32
    %136 = vector.broadcast %c0_i32_48 : i32 to vector<48x48xi32>
    %137 = arith.subi %136, %133 : vector<48x48xi32>
    %138 = arith.select %135, %137, %133 : vector<48x48xi1>, vector<48x48xi32>
    %c15_i32_49 = arith.constant 15 : i32
    %139 = vector.broadcast %c15_i32_49 : i32 to vector<48x48xi32>
    %140 = arith.cmpi sgt, %138, %139 : vector<48x48xi32>
    %c30_i32_50 = arith.constant 30 : i32
    %141 = vector.broadcast %c30_i32_50 : i32 to vector<48x48xi32>
    %142 = arith.subi %141, %138 : vector<48x48xi32>
    %143 = arith.select %140, %142, %138 : vector<48x48xi1>, vector<48x48xi32>
    %c0_i32_51 = arith.constant 0 : i32
    %144 = vector.broadcast %c0_i32_51 : i32 to vector<48x48xi32>
    %145 = arith.addi %144, %143 : vector<48x48xi32>
    %146 = arith.cmpi eq, %98, %145 : vector<48x48xi32>
    %147 = arith.andi %107, %146 : vector<48x48xi1>
    %cst_52 = arith.constant 0.221841291 : f32
    %cst_53 = arith.constant 0.000000e+00 : f32
    %148 = vector.broadcast %cst_52 : f32 to vector<48x48xf32>
    %149 = vector.broadcast %cst_53 : f32 to vector<48x48xf32>
    %150 = arith.select %147, %148, %149 : vector<48x48xi1>, vector<48x48xf32>
    %151 = arith.addf %129, %150 : vector<48x48xf32>
    %c2_i32_54 = arith.constant 2 : i32
    %152 = vector.broadcast %c2_i32_54 : i32 to vector<48x48xi32>
    %153 = arith.subi %102, %152 : vector<48x48xi32>
    %c2_i32_55 = arith.constant 2 : i32
    %154 = vector.broadcast %c2_i32_55 : i32 to vector<48x48xi32>
    %155 = arith.addi %153, %154 : vector<48x48xi32>
    %c0_i32_56 = arith.constant 0 : i32
    %156 = vector.broadcast %c0_i32_56 : i32 to vector<48x48xi32>
    %157 = arith.cmpi slt, %155, %156 : vector<48x48xi32>
    %c0_i32_57 = arith.constant 0 : i32
    %158 = vector.broadcast %c0_i32_57 : i32 to vector<48x48xi32>
    %159 = arith.subi %158, %155 : vector<48x48xi32>
    %160 = arith.select %157, %159, %155 : vector<48x48xi1>, vector<48x48xi32>
    %c15_i32_58 = arith.constant 15 : i32
    %161 = vector.broadcast %c15_i32_58 : i32 to vector<48x48xi32>
    %162 = arith.cmpi sgt, %160, %161 : vector<48x48xi32>
    %c30_i32_59 = arith.constant 30 : i32
    %163 = vector.broadcast %c30_i32_59 : i32 to vector<48x48xi32>
    %164 = arith.subi %163, %160 : vector<48x48xi32>
    %165 = arith.select %162, %164, %160 : vector<48x48xi1>, vector<48x48xi32>
    %c0_i32_60 = arith.constant 0 : i32
    %166 = vector.broadcast %c0_i32_60 : i32 to vector<48x48xi32>
    %167 = arith.addi %166, %165 : vector<48x48xi32>
    %168 = arith.cmpi eq, %98, %167 : vector<48x48xi32>
    %169 = arith.andi %107, %168 : vector<48x48xi1>
    %cst_61 = arith.constant 0.251379132 : f32
    %cst_62 = arith.constant 0.000000e+00 : f32
    %170 = vector.broadcast %cst_61 : f32 to vector<48x48xf32>
    %171 = vector.broadcast %cst_62 : f32 to vector<48x48xf32>
    %172 = arith.select %169, %170, %171 : vector<48x48xi1>, vector<48x48xf32>
    %173 = arith.addf %151, %172 : vector<48x48xf32>
    %c2_i32_63 = arith.constant 2 : i32
    %174 = vector.broadcast %c2_i32_63 : i32 to vector<48x48xi32>
    %175 = arith.subi %102, %174 : vector<48x48xi32>
    %c3_i32_64 = arith.constant 3 : i32
    %176 = vector.broadcast %c3_i32_64 : i32 to vector<48x48xi32>
    %177 = arith.addi %175, %176 : vector<48x48xi32>
    %c0_i32_65 = arith.constant 0 : i32
    %178 = vector.broadcast %c0_i32_65 : i32 to vector<48x48xi32>
    %179 = arith.cmpi slt, %177, %178 : vector<48x48xi32>
    %c0_i32_66 = arith.constant 0 : i32
    %180 = vector.broadcast %c0_i32_66 : i32 to vector<48x48xi32>
    %181 = arith.subi %180, %177 : vector<48x48xi32>
    %182 = arith.select %179, %181, %177 : vector<48x48xi1>, vector<48x48xi32>
    %c15_i32_67 = arith.constant 15 : i32
    %183 = vector.broadcast %c15_i32_67 : i32 to vector<48x48xi32>
    %184 = arith.cmpi sgt, %182, %183 : vector<48x48xi32>
    %c30_i32_68 = arith.constant 30 : i32
    %185 = vector.broadcast %c30_i32_68 : i32 to vector<48x48xi32>
    %186 = arith.subi %185, %182 : vector<48x48xi32>
    %187 = arith.select %184, %186, %182 : vector<48x48xi1>, vector<48x48xi32>
    %c0_i32_69 = arith.constant 0 : i32
    %188 = vector.broadcast %c0_i32_69 : i32 to vector<48x48xi32>
    %189 = arith.addi %188, %187 : vector<48x48xi32>
    %190 = arith.cmpi eq, %98, %189 : vector<48x48xi32>
    %191 = arith.andi %107, %190 : vector<48x48xi1>
    %cst_70 = arith.constant 0.221841291 : f32
    %cst_71 = arith.constant 0.000000e+00 : f32
    %192 = vector.broadcast %cst_70 : f32 to vector<48x48xf32>
    %193 = vector.broadcast %cst_71 : f32 to vector<48x48xf32>
    %194 = arith.select %191, %192, %193 : vector<48x48xi1>, vector<48x48xf32>
    %195 = arith.addf %173, %194 : vector<48x48xf32>
    %c2_i32_72 = arith.constant 2 : i32
    %196 = vector.broadcast %c2_i32_72 : i32 to vector<48x48xi32>
    %197 = arith.subi %102, %196 : vector<48x48xi32>
    %c4_i32_73 = arith.constant 4 : i32
    %198 = vector.broadcast %c4_i32_73 : i32 to vector<48x48xi32>
    %199 = arith.addi %197, %198 : vector<48x48xi32>
    %c0_i32_74 = arith.constant 0 : i32
    %200 = vector.broadcast %c0_i32_74 : i32 to vector<48x48xi32>
    %201 = arith.cmpi slt, %199, %200 : vector<48x48xi32>
    %c0_i32_75 = arith.constant 0 : i32
    %202 = vector.broadcast %c0_i32_75 : i32 to vector<48x48xi32>
    %203 = arith.subi %202, %199 : vector<48x48xi32>
    %204 = arith.select %201, %203, %199 : vector<48x48xi1>, vector<48x48xi32>
    %c15_i32_76 = arith.constant 15 : i32
    %205 = vector.broadcast %c15_i32_76 : i32 to vector<48x48xi32>
    %206 = arith.cmpi sgt, %204, %205 : vector<48x48xi32>
    %c30_i32_77 = arith.constant 30 : i32
    %207 = vector.broadcast %c30_i32_77 : i32 to vector<48x48xi32>
    %208 = arith.subi %207, %204 : vector<48x48xi32>
    %209 = arith.select %206, %208, %204 : vector<48x48xi1>, vector<48x48xi32>
    %c0_i32_78 = arith.constant 0 : i32
    %210 = vector.broadcast %c0_i32_78 : i32 to vector<48x48xi32>
    %211 = arith.addi %210, %209 : vector<48x48xi32>
    %212 = arith.cmpi eq, %98, %211 : vector<48x48xi32>
    %213 = arith.andi %107, %212 : vector<48x48xi1>
    %cst_79 = arith.constant 0.152469143 : f32
    %cst_80 = arith.constant 0.000000e+00 : f32
    %214 = vector.broadcast %cst_79 : f32 to vector<48x48xf32>
    %215 = vector.broadcast %cst_80 : f32 to vector<48x48xf32>
    %216 = arith.select %213, %214, %215 : vector<48x48xi1>, vector<48x48xf32>
    %217 = arith.addf %195, %216 : vector<48x48xf32>
    %c16_i32_81 = arith.constant 16 : i32
    %218 = vector.broadcast %c16_i32_81 : i32 to vector<48x48xi32>
    %219 = arith.subi %99, %218 : vector<48x48xi32>
    %c0_i32_82 = arith.constant 0 : i32
    %220 = vector.broadcast %c0_i32_82 : i32 to vector<48x48xi32>
    %221 = arith.cmpi sge, %219, %220 : vector<48x48xi32>
    %c16_i32_83 = arith.constant 16 : i32
    %222 = vector.broadcast %c16_i32_83 : i32 to vector<48x48xi32>
    %223 = arith.cmpi slt, %219, %222 : vector<48x48xi32>
    %224 = arith.andi %221, %223 : vector<48x48xi1>
    %c2_i32_84 = arith.constant 2 : i32
    %225 = vector.broadcast %c2_i32_84 : i32 to vector<48x48xi32>
    %226 = arith.subi %219, %225 : vector<48x48xi32>
    %c0_i32_85 = arith.constant 0 : i32
    %227 = vector.broadcast %c0_i32_85 : i32 to vector<48x48xi32>
    %228 = arith.addi %226, %227 : vector<48x48xi32>
    %c0_i32_86 = arith.constant 0 : i32
    %229 = vector.broadcast %c0_i32_86 : i32 to vector<48x48xi32>
    %230 = arith.cmpi slt, %228, %229 : vector<48x48xi32>
    %c0_i32_87 = arith.constant 0 : i32
    %231 = vector.broadcast %c0_i32_87 : i32 to vector<48x48xi32>
    %232 = arith.subi %231, %228 : vector<48x48xi32>
    %233 = arith.select %230, %232, %228 : vector<48x48xi1>, vector<48x48xi32>
    %c15_i32_88 = arith.constant 15 : i32
    %234 = vector.broadcast %c15_i32_88 : i32 to vector<48x48xi32>
    %235 = arith.cmpi sgt, %233, %234 : vector<48x48xi32>
    %c30_i32_89 = arith.constant 30 : i32
    %236 = vector.broadcast %c30_i32_89 : i32 to vector<48x48xi32>
    %237 = arith.subi %236, %233 : vector<48x48xi32>
    %238 = arith.select %235, %237, %233 : vector<48x48xi1>, vector<48x48xi32>
    %c16_i32_90 = arith.constant 16 : i32
    %239 = vector.broadcast %c16_i32_90 : i32 to vector<48x48xi32>
    %240 = arith.addi %239, %238 : vector<48x48xi32>
    %241 = arith.cmpi eq, %98, %240 : vector<48x48xi32>
    %242 = arith.andi %224, %241 : vector<48x48xi1>
    %cst_91 = arith.constant 0.152469143 : f32
    %cst_92 = arith.constant 0.000000e+00 : f32
    %243 = vector.broadcast %cst_91 : f32 to vector<48x48xf32>
    %244 = vector.broadcast %cst_92 : f32 to vector<48x48xf32>
    %245 = arith.select %242, %243, %244 : vector<48x48xi1>, vector<48x48xf32>
    %246 = arith.addf %217, %245 : vector<48x48xf32>
    %c2_i32_93 = arith.constant 2 : i32
    %247 = vector.broadcast %c2_i32_93 : i32 to vector<48x48xi32>
    %248 = arith.subi %219, %247 : vector<48x48xi32>
    %c1_i32_94 = arith.constant 1 : i32
    %249 = vector.broadcast %c1_i32_94 : i32 to vector<48x48xi32>
    %250 = arith.addi %248, %249 : vector<48x48xi32>
    %c0_i32_95 = arith.constant 0 : i32
    %251 = vector.broadcast %c0_i32_95 : i32 to vector<48x48xi32>
    %252 = arith.cmpi slt, %250, %251 : vector<48x48xi32>
    %c0_i32_96 = arith.constant 0 : i32
    %253 = vector.broadcast %c0_i32_96 : i32 to vector<48x48xi32>
    %254 = arith.subi %253, %250 : vector<48x48xi32>
    %255 = arith.select %252, %254, %250 : vector<48x48xi1>, vector<48x48xi32>
    %c15_i32_97 = arith.constant 15 : i32
    %256 = vector.broadcast %c15_i32_97 : i32 to vector<48x48xi32>
    %257 = arith.cmpi sgt, %255, %256 : vector<48x48xi32>
    %c30_i32_98 = arith.constant 30 : i32
    %258 = vector.broadcast %c30_i32_98 : i32 to vector<48x48xi32>
    %259 = arith.subi %258, %255 : vector<48x48xi32>
    %260 = arith.select %257, %259, %255 : vector<48x48xi1>, vector<48x48xi32>
    %c16_i32_99 = arith.constant 16 : i32
    %261 = vector.broadcast %c16_i32_99 : i32 to vector<48x48xi32>
    %262 = arith.addi %261, %260 : vector<48x48xi32>
    %263 = arith.cmpi eq, %98, %262 : vector<48x48xi32>
    %264 = arith.andi %224, %263 : vector<48x48xi1>
    %cst_100 = arith.constant 0.221841291 : f32
    %cst_101 = arith.constant 0.000000e+00 : f32
    %265 = vector.broadcast %cst_100 : f32 to vector<48x48xf32>
    %266 = vector.broadcast %cst_101 : f32 to vector<48x48xf32>
    %267 = arith.select %264, %265, %266 : vector<48x48xi1>, vector<48x48xf32>
    %268 = arith.addf %246, %267 : vector<48x48xf32>
    %c2_i32_102 = arith.constant 2 : i32
    %269 = vector.broadcast %c2_i32_102 : i32 to vector<48x48xi32>
    %270 = arith.subi %219, %269 : vector<48x48xi32>
    %c2_i32_103 = arith.constant 2 : i32
    %271 = vector.broadcast %c2_i32_103 : i32 to vector<48x48xi32>
    %272 = arith.addi %270, %271 : vector<48x48xi32>
    %c0_i32_104 = arith.constant 0 : i32
    %273 = vector.broadcast %c0_i32_104 : i32 to vector<48x48xi32>
    %274 = arith.cmpi slt, %272, %273 : vector<48x48xi32>
    %c0_i32_105 = arith.constant 0 : i32
    %275 = vector.broadcast %c0_i32_105 : i32 to vector<48x48xi32>
    %276 = arith.subi %275, %272 : vector<48x48xi32>
    %277 = arith.select %274, %276, %272 : vector<48x48xi1>, vector<48x48xi32>
    %c15_i32_106 = arith.constant 15 : i32
    %278 = vector.broadcast %c15_i32_106 : i32 to vector<48x48xi32>
    %279 = arith.cmpi sgt, %277, %278 : vector<48x48xi32>
    %c30_i32_107 = arith.constant 30 : i32
    %280 = vector.broadcast %c30_i32_107 : i32 to vector<48x48xi32>
    %281 = arith.subi %280, %277 : vector<48x48xi32>
    %282 = arith.select %279, %281, %277 : vector<48x48xi1>, vector<48x48xi32>
    %c16_i32_108 = arith.constant 16 : i32
    %283 = vector.broadcast %c16_i32_108 : i32 to vector<48x48xi32>
    %284 = arith.addi %283, %282 : vector<48x48xi32>
    %285 = arith.cmpi eq, %98, %284 : vector<48x48xi32>
    %286 = arith.andi %224, %285 : vector<48x48xi1>
    %cst_109 = arith.constant 0.251379132 : f32
    %cst_110 = arith.constant 0.000000e+00 : f32
    %287 = vector.broadcast %cst_109 : f32 to vector<48x48xf32>
    %288 = vector.broadcast %cst_110 : f32 to vector<48x48xf32>
    %289 = arith.select %286, %287, %288 : vector<48x48xi1>, vector<48x48xf32>
    %290 = arith.addf %268, %289 : vector<48x48xf32>
    %c2_i32_111 = arith.constant 2 : i32
    %291 = vector.broadcast %c2_i32_111 : i32 to vector<48x48xi32>
    %292 = arith.subi %219, %291 : vector<48x48xi32>
    %c3_i32_112 = arith.constant 3 : i32
    %293 = vector.broadcast %c3_i32_112 : i32 to vector<48x48xi32>
    %294 = arith.addi %292, %293 : vector<48x48xi32>
    %c0_i32_113 = arith.constant 0 : i32
    %295 = vector.broadcast %c0_i32_113 : i32 to vector<48x48xi32>
    %296 = arith.cmpi slt, %294, %295 : vector<48x48xi32>
    %c0_i32_114 = arith.constant 0 : i32
    %297 = vector.broadcast %c0_i32_114 : i32 to vector<48x48xi32>
    %298 = arith.subi %297, %294 : vector<48x48xi32>
    %299 = arith.select %296, %298, %294 : vector<48x48xi1>, vector<48x48xi32>
    %c15_i32_115 = arith.constant 15 : i32
    %300 = vector.broadcast %c15_i32_115 : i32 to vector<48x48xi32>
    %301 = arith.cmpi sgt, %299, %300 : vector<48x48xi32>
    %c30_i32_116 = arith.constant 30 : i32
    %302 = vector.broadcast %c30_i32_116 : i32 to vector<48x48xi32>
    %303 = arith.subi %302, %299 : vector<48x48xi32>
    %304 = arith.select %301, %303, %299 : vector<48x48xi1>, vector<48x48xi32>
    %c16_i32_117 = arith.constant 16 : i32
    %305 = vector.broadcast %c16_i32_117 : i32 to vector<48x48xi32>
    %306 = arith.addi %305, %304 : vector<48x48xi32>
    %307 = arith.cmpi eq, %98, %306 : vector<48x48xi32>
    %308 = arith.andi %224, %307 : vector<48x48xi1>
    %cst_118 = arith.constant 0.221841291 : f32
    %cst_119 = arith.constant 0.000000e+00 : f32
    %309 = vector.broadcast %cst_118 : f32 to vector<48x48xf32>
    %310 = vector.broadcast %cst_119 : f32 to vector<48x48xf32>
    %311 = arith.select %308, %309, %310 : vector<48x48xi1>, vector<48x48xf32>
    %312 = arith.addf %290, %311 : vector<48x48xf32>
    %c2_i32_120 = arith.constant 2 : i32
    %313 = vector.broadcast %c2_i32_120 : i32 to vector<48x48xi32>
    %314 = arith.subi %219, %313 : vector<48x48xi32>
    %c4_i32_121 = arith.constant 4 : i32
    %315 = vector.broadcast %c4_i32_121 : i32 to vector<48x48xi32>
    %316 = arith.addi %314, %315 : vector<48x48xi32>
    %c0_i32_122 = arith.constant 0 : i32
    %317 = vector.broadcast %c0_i32_122 : i32 to vector<48x48xi32>
    %318 = arith.cmpi slt, %316, %317 : vector<48x48xi32>
    %c0_i32_123 = arith.constant 0 : i32
    %319 = vector.broadcast %c0_i32_123 : i32 to vector<48x48xi32>
    %320 = arith.subi %319, %316 : vector<48x48xi32>
    %321 = arith.select %318, %320, %316 : vector<48x48xi1>, vector<48x48xi32>
    %c15_i32_124 = arith.constant 15 : i32
    %322 = vector.broadcast %c15_i32_124 : i32 to vector<48x48xi32>
    %323 = arith.cmpi sgt, %321, %322 : vector<48x48xi32>
    %c30_i32_125 = arith.constant 30 : i32
    %324 = vector.broadcast %c30_i32_125 : i32 to vector<48x48xi32>
    %325 = arith.subi %324, %321 : vector<48x48xi32>
    %326 = arith.select %323, %325, %321 : vector<48x48xi1>, vector<48x48xi32>
    %c16_i32_126 = arith.constant 16 : i32
    %327 = vector.broadcast %c16_i32_126 : i32 to vector<48x48xi32>
    %328 = arith.addi %327, %326 : vector<48x48xi32>
    %329 = arith.cmpi eq, %98, %328 : vector<48x48xi32>
    %330 = arith.andi %224, %329 : vector<48x48xi1>
    %cst_127 = arith.constant 0.152469143 : f32
    %cst_128 = arith.constant 0.000000e+00 : f32
    %331 = vector.broadcast %cst_127 : f32 to vector<48x48xf32>
    %332 = vector.broadcast %cst_128 : f32 to vector<48x48xf32>
    %333 = arith.select %330, %331, %332 : vector<48x48xi1>, vector<48x48xf32>
    %334 = arith.addf %312, %333 : vector<48x48xf32>
    %c32_i32 = arith.constant 32 : i32
    %335 = vector.broadcast %c32_i32 : i32 to vector<48x48xi32>
    %336 = arith.subi %99, %335 : vector<48x48xi32>
    %c0_i32_129 = arith.constant 0 : i32
    %337 = vector.broadcast %c0_i32_129 : i32 to vector<48x48xi32>
    %338 = arith.cmpi sge, %336, %337 : vector<48x48xi32>
    %c16_i32_130 = arith.constant 16 : i32
    %339 = vector.broadcast %c16_i32_130 : i32 to vector<48x48xi32>
    %340 = arith.cmpi slt, %336, %339 : vector<48x48xi32>
    %341 = arith.andi %338, %340 : vector<48x48xi1>
    %c2_i32_131 = arith.constant 2 : i32
    %342 = vector.broadcast %c2_i32_131 : i32 to vector<48x48xi32>
    %343 = arith.subi %336, %342 : vector<48x48xi32>
    %c0_i32_132 = arith.constant 0 : i32
    %344 = vector.broadcast %c0_i32_132 : i32 to vector<48x48xi32>
    %345 = arith.addi %343, %344 : vector<48x48xi32>
    %c0_i32_133 = arith.constant 0 : i32
    %346 = vector.broadcast %c0_i32_133 : i32 to vector<48x48xi32>
    %347 = arith.cmpi slt, %345, %346 : vector<48x48xi32>
    %c0_i32_134 = arith.constant 0 : i32
    %348 = vector.broadcast %c0_i32_134 : i32 to vector<48x48xi32>
    %349 = arith.subi %348, %345 : vector<48x48xi32>
    %350 = arith.select %347, %349, %345 : vector<48x48xi1>, vector<48x48xi32>
    %c15_i32_135 = arith.constant 15 : i32
    %351 = vector.broadcast %c15_i32_135 : i32 to vector<48x48xi32>
    %352 = arith.cmpi sgt, %350, %351 : vector<48x48xi32>
    %c30_i32_136 = arith.constant 30 : i32
    %353 = vector.broadcast %c30_i32_136 : i32 to vector<48x48xi32>
    %354 = arith.subi %353, %350 : vector<48x48xi32>
    %355 = arith.select %352, %354, %350 : vector<48x48xi1>, vector<48x48xi32>
    %c32_i32_137 = arith.constant 32 : i32
    %356 = vector.broadcast %c32_i32_137 : i32 to vector<48x48xi32>
    %357 = arith.addi %356, %355 : vector<48x48xi32>
    %358 = arith.cmpi eq, %98, %357 : vector<48x48xi32>
    %359 = arith.andi %341, %358 : vector<48x48xi1>
    %cst_138 = arith.constant 0.152469143 : f32
    %cst_139 = arith.constant 0.000000e+00 : f32
    %360 = vector.broadcast %cst_138 : f32 to vector<48x48xf32>
    %361 = vector.broadcast %cst_139 : f32 to vector<48x48xf32>
    %362 = arith.select %359, %360, %361 : vector<48x48xi1>, vector<48x48xf32>
    %363 = arith.addf %334, %362 : vector<48x48xf32>
    %c2_i32_140 = arith.constant 2 : i32
    %364 = vector.broadcast %c2_i32_140 : i32 to vector<48x48xi32>
    %365 = arith.subi %336, %364 : vector<48x48xi32>
    %c1_i32_141 = arith.constant 1 : i32
    %366 = vector.broadcast %c1_i32_141 : i32 to vector<48x48xi32>
    %367 = arith.addi %365, %366 : vector<48x48xi32>
    %c0_i32_142 = arith.constant 0 : i32
    %368 = vector.broadcast %c0_i32_142 : i32 to vector<48x48xi32>
    %369 = arith.cmpi slt, %367, %368 : vector<48x48xi32>
    %c0_i32_143 = arith.constant 0 : i32
    %370 = vector.broadcast %c0_i32_143 : i32 to vector<48x48xi32>
    %371 = arith.subi %370, %367 : vector<48x48xi32>
    %372 = arith.select %369, %371, %367 : vector<48x48xi1>, vector<48x48xi32>
    %c15_i32_144 = arith.constant 15 : i32
    %373 = vector.broadcast %c15_i32_144 : i32 to vector<48x48xi32>
    %374 = arith.cmpi sgt, %372, %373 : vector<48x48xi32>
    %c30_i32_145 = arith.constant 30 : i32
    %375 = vector.broadcast %c30_i32_145 : i32 to vector<48x48xi32>
    %376 = arith.subi %375, %372 : vector<48x48xi32>
    %377 = arith.select %374, %376, %372 : vector<48x48xi1>, vector<48x48xi32>
    %c32_i32_146 = arith.constant 32 : i32
    %378 = vector.broadcast %c32_i32_146 : i32 to vector<48x48xi32>
    %379 = arith.addi %378, %377 : vector<48x48xi32>
    %380 = arith.cmpi eq, %98, %379 : vector<48x48xi32>
    %381 = arith.andi %341, %380 : vector<48x48xi1>
    %cst_147 = arith.constant 0.221841291 : f32
    %cst_148 = arith.constant 0.000000e+00 : f32
    %382 = vector.broadcast %cst_147 : f32 to vector<48x48xf32>
    %383 = vector.broadcast %cst_148 : f32 to vector<48x48xf32>
    %384 = arith.select %381, %382, %383 : vector<48x48xi1>, vector<48x48xf32>
    %385 = arith.addf %363, %384 : vector<48x48xf32>
    %c2_i32_149 = arith.constant 2 : i32
    %386 = vector.broadcast %c2_i32_149 : i32 to vector<48x48xi32>
    %387 = arith.subi %336, %386 : vector<48x48xi32>
    %c2_i32_150 = arith.constant 2 : i32
    %388 = vector.broadcast %c2_i32_150 : i32 to vector<48x48xi32>
    %389 = arith.addi %387, %388 : vector<48x48xi32>
    %c0_i32_151 = arith.constant 0 : i32
    %390 = vector.broadcast %c0_i32_151 : i32 to vector<48x48xi32>
    %391 = arith.cmpi slt, %389, %390 : vector<48x48xi32>
    %c0_i32_152 = arith.constant 0 : i32
    %392 = vector.broadcast %c0_i32_152 : i32 to vector<48x48xi32>
    %393 = arith.subi %392, %389 : vector<48x48xi32>
    %394 = arith.select %391, %393, %389 : vector<48x48xi1>, vector<48x48xi32>
    %c15_i32_153 = arith.constant 15 : i32
    %395 = vector.broadcast %c15_i32_153 : i32 to vector<48x48xi32>
    %396 = arith.cmpi sgt, %394, %395 : vector<48x48xi32>
    %c30_i32_154 = arith.constant 30 : i32
    %397 = vector.broadcast %c30_i32_154 : i32 to vector<48x48xi32>
    %398 = arith.subi %397, %394 : vector<48x48xi32>
    %399 = arith.select %396, %398, %394 : vector<48x48xi1>, vector<48x48xi32>
    %c32_i32_155 = arith.constant 32 : i32
    %400 = vector.broadcast %c32_i32_155 : i32 to vector<48x48xi32>
    %401 = arith.addi %400, %399 : vector<48x48xi32>
    %402 = arith.cmpi eq, %98, %401 : vector<48x48xi32>
    %403 = arith.andi %341, %402 : vector<48x48xi1>
    %cst_156 = arith.constant 0.251379132 : f32
    %cst_157 = arith.constant 0.000000e+00 : f32
    %404 = vector.broadcast %cst_156 : f32 to vector<48x48xf32>
    %405 = vector.broadcast %cst_157 : f32 to vector<48x48xf32>
    %406 = arith.select %403, %404, %405 : vector<48x48xi1>, vector<48x48xf32>
    %407 = arith.addf %385, %406 : vector<48x48xf32>
    %c2_i32_158 = arith.constant 2 : i32
    %408 = vector.broadcast %c2_i32_158 : i32 to vector<48x48xi32>
    %409 = arith.subi %336, %408 : vector<48x48xi32>
    %c3_i32_159 = arith.constant 3 : i32
    %410 = vector.broadcast %c3_i32_159 : i32 to vector<48x48xi32>
    %411 = arith.addi %409, %410 : vector<48x48xi32>
    %c0_i32_160 = arith.constant 0 : i32
    %412 = vector.broadcast %c0_i32_160 : i32 to vector<48x48xi32>
    %413 = arith.cmpi slt, %411, %412 : vector<48x48xi32>
    %c0_i32_161 = arith.constant 0 : i32
    %414 = vector.broadcast %c0_i32_161 : i32 to vector<48x48xi32>
    %415 = arith.subi %414, %411 : vector<48x48xi32>
    %416 = arith.select %413, %415, %411 : vector<48x48xi1>, vector<48x48xi32>
    %c15_i32_162 = arith.constant 15 : i32
    %417 = vector.broadcast %c15_i32_162 : i32 to vector<48x48xi32>
    %418 = arith.cmpi sgt, %416, %417 : vector<48x48xi32>
    %c30_i32_163 = arith.constant 30 : i32
    %419 = vector.broadcast %c30_i32_163 : i32 to vector<48x48xi32>
    %420 = arith.subi %419, %416 : vector<48x48xi32>
    %421 = arith.select %418, %420, %416 : vector<48x48xi1>, vector<48x48xi32>
    %c32_i32_164 = arith.constant 32 : i32
    %422 = vector.broadcast %c32_i32_164 : i32 to vector<48x48xi32>
    %423 = arith.addi %422, %421 : vector<48x48xi32>
    %424 = arith.cmpi eq, %98, %423 : vector<48x48xi32>
    %425 = arith.andi %341, %424 : vector<48x48xi1>
    %cst_165 = arith.constant 0.221841291 : f32
    %cst_166 = arith.constant 0.000000e+00 : f32
    %426 = vector.broadcast %cst_165 : f32 to vector<48x48xf32>
    %427 = vector.broadcast %cst_166 : f32 to vector<48x48xf32>
    %428 = arith.select %425, %426, %427 : vector<48x48xi1>, vector<48x48xf32>
    %429 = arith.addf %407, %428 : vector<48x48xf32>
    %c2_i32_167 = arith.constant 2 : i32
    %430 = vector.broadcast %c2_i32_167 : i32 to vector<48x48xi32>
    %431 = arith.subi %336, %430 : vector<48x48xi32>
    %c4_i32_168 = arith.constant 4 : i32
    %432 = vector.broadcast %c4_i32_168 : i32 to vector<48x48xi32>
    %433 = arith.addi %431, %432 : vector<48x48xi32>
    %c0_i32_169 = arith.constant 0 : i32
    %434 = vector.broadcast %c0_i32_169 : i32 to vector<48x48xi32>
    %435 = arith.cmpi slt, %433, %434 : vector<48x48xi32>
    %c0_i32_170 = arith.constant 0 : i32
    %436 = vector.broadcast %c0_i32_170 : i32 to vector<48x48xi32>
    %437 = arith.subi %436, %433 : vector<48x48xi32>
    %438 = arith.select %435, %437, %433 : vector<48x48xi1>, vector<48x48xi32>
    %c15_i32_171 = arith.constant 15 : i32
    %439 = vector.broadcast %c15_i32_171 : i32 to vector<48x48xi32>
    %440 = arith.cmpi sgt, %438, %439 : vector<48x48xi32>
    %c30_i32_172 = arith.constant 30 : i32
    %441 = vector.broadcast %c30_i32_172 : i32 to vector<48x48xi32>
    %442 = arith.subi %441, %438 : vector<48x48xi32>
    %443 = arith.select %440, %442, %438 : vector<48x48xi1>, vector<48x48xi32>
    %c32_i32_173 = arith.constant 32 : i32
    %444 = vector.broadcast %c32_i32_173 : i32 to vector<48x48xi32>
    %445 = arith.addi %444, %443 : vector<48x48xi32>
    %446 = arith.cmpi eq, %98, %445 : vector<48x48xi32>
    %447 = arith.andi %341, %446 : vector<48x48xi1>
    %cst_174 = arith.constant 0.152469143 : f32
    %cst_175 = arith.constant 0.000000e+00 : f32
    %448 = vector.broadcast %cst_174 : f32 to vector<48x48xf32>
    %449 = vector.broadcast %cst_175 : f32 to vector<48x48xf32>
    %450 = arith.select %447, %448, %449 : vector<48x48xi1>, vector<48x48xf32>
    %451 = arith.addf %429, %450 : vector<48x48xf32>
    %c0 = arith.constant 0 : index
    %c0_176 = arith.constant 0 : index
    %452 = vector.load %arg0[%c0, %c0_176] : memref<16x48xf32, #tpu.memory_space<vmem>>, vector<16x48xf32>
    %cst_177 = arith.constant dense<0.000000e+00> : vector<16x48xf32>
    %453 = tpu.matmul %452, %451, %cst_177 {dimension_numbers = #tpu.dot_dimension_numbers<[1], [0], [0], [1], [0, 0, 1, 1], [], []>, precision = #tpu.contract_precision<fp32>} : vector<16x48xf32>, vector<48x48xf32>, vector<16x48xf32> -> vector<16x48xf32>
    %cst_178 = arith.constant dense<0.000000e+00> : vector<16x48xf32>
    %454 = tpu.matmul %97, %453, %cst_178 {dimension_numbers = #tpu.dot_dimension_numbers<[1], [0], [0], [1], [0, 0, 1, 1], [], []>, precision = #tpu.contract_precision<fp32>} : vector<16x16xf32>, vector<16x48xf32>, vector<16x48xf32> -> vector<16x48xf32>
    %c0_179 = arith.constant 0 : index
    %c0_180 = arith.constant 0 : index
    %455 = vector.load %arg1[%c0_179, %c0_180] : memref<16x48xf32, #tpu.memory_space<vmem>>, vector<16x48xf32>
    %456 = arith.subf %454, %455 : vector<16x48xf32>
    %c0_181 = arith.constant 0 : index
    %c0_182 = arith.constant 0 : index
    %457 = vector.load %arg3[%c0_181, %c0_182] : memref<16x48xf32, #tpu.memory_space<vmem>>, vector<16x48xf32>
    tpu.vector_store %arg3[%c0_181, %c0_182], %456 {strides = array<i32>} : memref<16x48xf32, #tpu.memory_space<vmem>>, vector<16x48xf32>,
    %458 = arith.mulf %456, %456 : vector<16x48xf32>
    %459 = vector.shape_cast %458 : vector<16x48xf32> to vector<1x16x48xf32>
    %cst_183 = arith.constant dense<0.000000e+00> : vector<1xf32>
    %460 = vector.multi_reduction <add>, %459, %cst_183 [1, 2] : vector<1x16x48xf32> to vector<1xf32>
    %461 = vector.shape_cast %460 : vector<1xf32> to vector<1x1x1xf32>
    %462 = vector.extract %461[0, 0, 0] : f32 from vector<1x1x1xf32>
    %cst_184 = arith.constant 0.00130208337 : f32
    %463 = arith.mulf %462, %cst_184 : f32
    %c0_185 = arith.constant 0 : index
    %464 = memref.load %arg2[%c0_185] : memref<1xf32, #tpu.memory_space<smem>>
    memref.store %463, %arg2[%c0_185] : memref<1xf32, #tpu.memory_space<smem>>
    return
  }
}

</mosaic_0001>

<llo_original>
// kernel: _tone_loss_core.1
$region0: #{_tone_loss_core.1}
  #allocation0 [shape = 'u32[]', space=smem, size = 0x4, offset = 0x4, fixed_abs, tag = 'smem constant byte address 0x4 - core index']
  #allocation1 [shape = 'u32[144,128]{1,0:T(1,128)}', space=vmem, size = 0x12000, scoped, tag = 'internal scratch']
  %s0 = inlined_call_operand.vmem [shape: f32[16,48], index: 0, kind: input, shape index: {}]
  %s1 = inlined_call_operand.vmem [shape: f32[16,48], index: 1, kind: input, shape index: {}]
  %s2 = inlined_call_operand.hbm [shape: f32[1], index: 2, kind: output, shape index: {0}]
  %s3 = inlined_call_operand.hbm [shape: f32[16,48], index: 3, kind: output, shape index: {1}]
  %4 = xla_tuple %s2, %s3
  %s5 = sld [smem:[#allocation0]]
  $region26: #{_tone_loss_core.1} parent=0
    _
  %s7 = ssub.s32 1, %s5
  %s8 = scalar_select 0, %s7, %s5
  $region1: #{_tone_loss_core.1} parent=0
    #allocation2 [shape = 'u8[512]{0}', space=smem, size = 0x200, scoped, tag = 'output window, operand 0, single buffered']
    #allocation3 [shape = 's32[1]{0}', space=sflag, size = 0x4, scoped, tag = 'scoped memory for _tone_loss_core.1']
    #allocation4 [shape = 's32[1]{0}', space=sflag, size = 0x4, scoped, tag = 'scoped memory for _tone_loss_core.1']
    #allocation5 [shape = 'u8[8192]{0}', space=vmem, size = 0x2000, scoped, tag = 'output window, operand 1, single buffered']
    %9 = vsyncpa [#allocation4], 0
    %10 = vsyncpa [#allocation3], 0
    // Predicated region
    $region2: #{_tone_loss_core.1} parent=1 // pred_check
      _
    $region3: #{_tone_loss_core.1} parent=1 // pred_check_branch
      %12 = sbr.rel (0) target = $region5
    $region4: #{_tone_loss_core.1} parent=1 // pred_region
      _
    $region5: #{_tone_loss_core.1} parent=1 // pred_fallthru
      _
    // Predicated region
    $region6: #{_tone_loss_core.1} parent=1 // pred_check
      _
    $region7: #{_tone_loss_core.1} parent=1 // pred_check_branch
      %14 = sbr.rel (0) target = $region9
    $region8: #{_tone_loss_core.1} parent=1 // pred_region
      _
    $region9: #{_tone_loss_core.1} parent=1 // pred_fallthru
      _
    %v15 = vlaneseq
    %v16 = vshrl.u32 %v15, 7
    %v17 = vadd.s32 %v16, 8
    %v18 = vlaneseq
    %v19 = vand.u32 %v18, 127
    %v20 = vsub.s32 %v16, 2
    %v21 = vsub.s32 %v17, 2
    %vm22 = vcmp.lt.s32.totalorder %v20, 0
    %vm23 = vcmp.lt.s32.totalorder %v21, 0
    %v24 = vsub.s32 0, %v20
    %v25 = vsub.s32 0, %v21
    %v26 = vsel %vm22, %v24, %v20
    %v27 = vsel %vm23, %v25, %v21
    %vm28 = vcmp.gt.s32.totalorder %v26, 15
    %vm29 = vcmp.gt.s32.totalorder %v27, 15
    %v30 = vsub.s32 30, %v26
    %v31 = vsub.s32 30, %v27
    %v32 = vsel %vm28, %v30, %v26
    %v33 = vsel %vm29, %v31, %v27
    %vm34 = vcmp.eq.s32.totalorder %v19, %v32
    %vm35 = vcmp.eq.s32.totalorder %v19, %v33
    %v36 = vsel %vm34, 0.15246914, 0.0
    %v37 = vsel %vm35, 0.15246914, 0.0
    %v38 = vadd.f32 %v36, 0.0
    %v39 = vadd.f32 %v37, 0.0
    %v40 = vadd.s32 %v20, 1
    %v41 = vadd.s32 %v21, 1
    %vm42 = vcmp.lt.s32.totalorder %v40, 0
    %vm43 = vcmp.lt.s32.totalorder %v41, 0
    %v44 = vsub.s32 0, %v40
    %v45 = vsub.s32 0, %v41
    %v46 = vsel %vm42, %v44, %v40
    %v47 = vsel %vm43, %v45, %v41
    %vm48 = vcmp.gt.s32.totalorder %v46, 15
    %vm49 = vcmp.gt.s32.totalorder %v47, 15
    %v50 = vsub.s32 30, %v46
    %v51 = vsub.s32 30, %v47
    %v52 = vsel %vm48, %v50, %v46
    %v53 = vsel %vm49, %v51, %v47
    %vm54 = vcmp.eq.s32.totalorder %v19, %v52
    %vm55 = vcmp.eq.s32.totalorder %v19, %v53
    %v56 = vsel %vm54, 0.22184129, 0.0
    %v57 = vsel %vm55, 0.22184129, 0.0
    %v58 = vadd.f32 %v38, %v56
    %v59 = vadd.f32 %v39, %v57
    %vm60 = vcmp.lt.s32.totalorder %v16, 0
    %vm61 = vcmp.lt.s32.totalorder %v17, 0
    %v62 = vsub.s32 0, %v16
    %v63 = vsub.s32 0, %v17
    %v64 = vsel %vm60, %v62, %v16
    %v65 = vsel %vm61, %v63, %v17
    %vm66 = vcmp.gt.s32.totalorder %v64, 15
    %vm67 = vcmp.gt.s32.totalorder %v65, 15
    %v68 = vsub.s32 30, %v64
    %v69 = vsub.s32 30, %v65
    %v70 = vsel %vm66, %v68, %v64
    %v71 = vsel %vm67, %v69, %v65
    %vm72 = vcmp.eq.s32.totalorder %v19, %v70
    %vm73 = vcmp.eq.s32.totalorder %v19, %v71
    %v74 = vsel %vm72, 0.25137913, 0.0
    %v75 = vsel %vm73, 0.25137913, 0.0
    %v76 = vadd.f32 %v58, %v74
    %v77 = vadd.f32 %v59, %v75
    %v78 = vadd.s32 %v20, 3
    %v79 = vadd.s32 %v21, 3
    %vm80 = vcmp.lt.s32.totalorder %v78, 0
    %vm81 = vcmp.lt.s32.totalorder %v79, 0
    %v82 = vsub.s32 0, %v78
    %v83 = vsub.s32 0, %v79
    %v84 = vsel %vm80, %v82, %v78
    %v85 = vsel %vm81, %v83, %v79
    %vm86 = vcmp.gt.s32.totalorder %v84, 15
    %vm87 = vcmp.gt.s32.totalorder %v85, 15
    %v88 = vsub.s32 30, %v84
    %v89 = vsub.s32 30, %v85
    %v90 = vsel %vm86, %v88, %v84
    %v91 = vsel %vm87, %v89, %v85
    %vm92 = vcmp.eq.s32.totalorder %v19, %v90
    %vm93 = vcmp.eq.s32.totalorder %v19, %v91
    %v94 = vsel %vm92, 0.22184129, 0.0
    %v95 = vsel %vm93, 0.22184129, 0.0
    %v96 = vadd.f32 %v76, %v94
    %v97 = vadd.f32 %v77, %v95
    %v98 = vadd.s32 %v20, 4
    %v99 = vadd.s32 %v21, 4
    %vm100 = vcmp.lt.s32.totalorder %v98, 0
    %vm101 = vcmp.lt.s32.totalorder %v99, 0
    %v102 = vsub.s32 0, %v98
    %v103 = vsub.s32 0, %v99
    %v104 = vsel %vm100, %v102, %v98
    %v105 = vsel %vm101, %v103, %v99
    %vm106 = vcmp.gt.s32.totalorder %v104, 15
    %vm107 = vcmp.gt.s32.totalorder %v105, 15
    %v108 = vsub.s32 30, %v104
    %v109 = vsub.s32 30, %v105
    %v110 = vsel %vm106, %v108, %v104
    %v111 = vsel %vm107, %v109, %v105
    %vm112 = vcmp.eq.s32.totalorder %v19, %v110
    %vm113 = vcmp.eq.s32.totalorder %v19, %v111
    %v114 = vsel %vm112, 0.15246914, 0.0
    %v115 = vsel %vm113, 0.15246914, 0.0
    %v116 = vadd.f32 %v96, %v114
    %v117 = vadd.f32 %v97, %v115
    %v118 = vadd.s32 %v16, 16
    %v119 = vadd.s32 %v16, 24
    %v120 = vadd.s32 %v16, 32
    %v121 = vadd.s32 %v16, 40
    %vm122 = vcmp.ge.s32.totalorder %v19, 0
    %vm123 = vcmp.lt.s32.totalorder %v19, 16
    %vm124 = vmand %vm122, %vm123
    %v125 = vsub.s32 %v19, 2
    %vm126 = vcmp.lt.s32.totalorder %v125, 0
    %v127 = vsub.s32 0, %v125
    %v128 = vsel %vm126, %v127, %v125
    %vm129 = vcmp.gt.s32.totalorder %v128, 15
    %v130 = vsub.s32 30, %v128
    %v131 = vsel %vm129, %v130, %v128
    %vm132 = vcmp.eq.s32.totalorder %v16, %v131
    %vm133 = vcmp.eq.s32.totalorder %v17, %v131
    %vm134 = vcmp.eq.s32.totalorder %v118, %v131
    %vm135 = vcmp.eq.s32.totalorder %v119, %v131
    %vm136 = vcmp.eq.s32.totalorder %v120, %v131
    %vm137 = vcmp.eq.s32.totalorder %v121, %v131
    %vm138 = vmand %vm124, %vm132
    %vm139 = vmand %vm124, %vm133
    %vm140 = vmand %vm124, %vm134
    %vm141 = vmand %vm124, %vm135
    %vm142 = vmand %vm124, %vm136
    %vm143 = vmand %vm124, %vm137
    %v144 = vsel %vm138, 0.15246914, 0.0
    %v145 = vsel %vm139, 0.15246914, 0.0
    %v146 = vsel %vm140, 0.15246914, 0.0
    %v147 = vsel %vm141, 0.15246914, 0.0
    %v148 = vsel %vm142, 0.15246914, 0.0
    %v149 = vsel %vm143, 0.15246914, 0.0
    %v150 = vadd.f32 %v144, 0.0
    %v151 = vadd.f32 %v145, 0.0
    %v152 = vadd.f32 %v146, 0.0
    %v153 = vadd.f32 %v147, 0.0
    %v154 = vadd.f32 %v148, 0.0
    %v155 = vadd.f32 %v149, 0.0
    %v156 = vadd.s32 %v125, 1
    %vm157 = vcmp.lt.s32.totalorder %v156, 0
    %v158 = vsub.s32 0, %v156
    %v159 = vsel %vm157, %v158, %v156
    %vm160 = vcmp.gt.s32.totalorder %v159, 15
    %v161 = vsub.s32 30, %v159
    %v162 = vsel %vm160, %v161, %v159
    %vm163 = vcmp.eq.s32.totalorder %v16, %v162
    %vm164 = vcmp.eq.s32.totalorder %v17, %v162
    %vm165 = vcmp.eq.s32.totalorder %v118, %v162
    %vm166 = vcmp.eq.s32.totalorder %v119, %v162
    %vm167 = vcmp.eq.s32.totalorder %v120, %v162
    %vm168 = vcmp.eq.s32.totalorder %v121, %v162
    %vm169 = vmand %vm124, %vm163
    %vm170 = vmand %vm124, %vm164
    %vm171 = vmand %vm124, %vm165
    %vm172 = vmand %vm124, %vm166
    %vm173 = vmand %vm124, %vm167
    %vm174 = vmand %vm124, %vm168
    %v175 = vsel %vm169, 0.22184129, 0.0
    %v176 = vsel %vm170, 0.22184129, 0.0
    %v177 = vsel %vm171, 0.22184129, 0.0
    %v178 = vsel %vm172, 0.22184129, 0.0
    %v179 = vsel %vm173, 0.22184129, 0.0
    %v180 = vsel %vm174, 0.22184129, 0.0
    %v181 = vadd.f32 %v150, %v175
    %v182 = vadd.f32 %v151, %v176
    %v183 = vadd.f32 %v152, %v177
    %v184 = vadd.f32 %v153, %v178
    %v185 = vadd.f32 %v154, %v179
    %v186 = vadd.f32 %v155, %v180
    %vm187 = vcmp.lt.s32.totalorder %v19, 0
    %v188 = vsub.s32 0, %v19
    %v189 = vsel %vm187, %v188, %v19
    %vm190 = vcmp.gt.s32.totalorder %v189, 15
    %v191 = vsub.s32 30, %v189
    %v192 = vsel %vm190, %v191, %v189
    %vm193 = vcmp.eq.s32.totalorder %v16, %v192
    %vm194 = vcmp.eq.s32.totalorder %v17, %v192
    %vm195 = vcmp.eq.s32.totalorder %v118, %v192
    %vm196 = vcmp.eq.s32.totalorder %v119, %v192
    %vm197 = vcmp.eq.s32.totalorder %v120, %v192
    %vm198 = vcmp.eq.s32.totalorder %v121, %v192
    %vm199 = vmand %vm124, %vm193
    %vm200 = vmand %vm124, %vm194
    %vm201 = vmand %vm124, %vm195
    %vm202 = vmand %vm124, %vm196
    %vm203 = vmand %vm124, %vm197
    %vm204 = vmand %vm124, %vm198
    %v205 = vsel %vm199, 0.25137913, 0.0
    %v206 = vsel %vm200, 0.25137913, 0.0
    %v207 = vsel %vm201, 0.25137913, 0.0
    %v208 = vsel %vm202, 0.25137913, 0.0
    %v209 = vsel %vm203, 0.25137913, 0.0
    %v210 = vsel %vm204, 0.25137913, 0.0
    %v211 = vadd.f32 %v181, %v205
    %v212 = vadd.f32 %v182, %v206
    %v213 = vadd.f32 %v183, %v207
    %v214 = vadd.f32 %v184, %v208
    %v215 = vadd.f32 %v185, %v209
    %v216 = vadd.f32 %v186, %v210
    %v217 = vadd.s32 %v125, 3
    %vm218 = vcmp.lt.s32.totalorder %v217, 0
    %v219 = vsub.s32 0, %v217
    %v220 = vsel %vm218, %v219, %v217
    %vm221 = vcmp.gt.s32.totalorder %v220, 15
    %v222 = vsub.s32 30, %v220
    %v223 = vsel %vm221, %v222, %v220
    %vm224 = vcmp.eq.s32.totalorder %v16, %v223
    %vm225 = vcmp.eq.s32.totalorder %v17, %v223
    %vm226 = vcmp.eq.s32.totalorder %v118, %v223
    %vm227 = vcmp.eq.s32.totalorder %v119, %v223
    %vm228 = vcmp.eq.s32.totalorder %v120, %v223
    %vm229 = vcmp.eq.s32.totalorder %v121, %v223
    %vm230 = vmand %vm124, %vm224
    %vm231 = vmand %vm124, %vm225
    %vm232 = vmand %vm124, %vm226
    %vm233 = vmand %vm124, %vm227
    %vm234 = vmand %vm124, %vm228
    %vm235 = vmand %vm124, %vm229
    %v236 = vsel %vm230, 0.22184129, 0.0
    %v237 = vsel %vm231, 0.22184129, 0.0
    %v238 = vsel %vm232, 0.22184129, 0.0
    %v239 = vsel %vm233, 0.22184129, 0.0
    %v240 = vsel %vm234, 0.22184129, 0.0
    %v241 = vsel %vm235, 0.22184129, 0.0
    %v242 = vadd.f32 %v211, %v236
    %v243 = vadd.f32 %v212, %v237
    %v244 = vadd.f32 %v213, %v238
    %v245 = vadd.f32 %v214, %v239
    %v246 = vadd.f32 %v215, %v240
    %v247 = vadd.f32 %v216, %v241
    %v248 = vadd.s32 %v125, 4
    %vm249 = vcmp.lt.s32.totalorder %v248, 0
    %v250 = vsub.s32 0, %v248
    %v251 = vsel %vm249, %v250, %v248
    %vm252 = vcmp.gt.s32.totalorder %v251, 15
    %v253 = vsub.s32 30, %v251
    %v254 = vsel %vm252, %v253, %v251
    %vm255 = vcmp.eq.s32.totalorder %v16, %v254
    %vm256 = vcmp.eq.s32.totalorder %v17, %v254
    %vm257 = vcmp.eq.s32.totalorder %v118, %v254
    %vm258 = vcmp.eq.s32.totalorder %v119, %v254
    %vm259 = vcmp.eq.s32.totalorder %v120, %v254
    %vm260 = vcmp.eq.s32.totalorder %v121, %v254
    %vm261 = vmand %vm124, %vm255
    %vm262 = vmand %vm124, %vm256
    %vm263 = vmand %vm124, %vm257
    %vm264 = vmand %vm124, %vm258
    %vm265 = vmand %vm124, %vm259
    %vm266 = vmand %vm124, %vm260
    %v267 = vsel %vm261, 0.15246914, 0.0
    %v268 = vsel %vm262, 0.15246914, 0.0
    %v269 = vsel %vm263, 0.15246914, 0.0
    %v270 = vsel %vm264, 0.15246914, 0.0
    %v271 = vsel %vm265, 0.15246914, 0.0
    %v272 = vsel %vm266, 0.15246914, 0.0
    %v273 = vadd.f32 %v242, %v267
    %v274 = vadd.f32 %v243, %v268
    %v275 = vadd.f32 %v244, %v269
    %v276 = vadd.f32 %v245, %v270
    %v277 = vadd.f32 %v246, %v271
    %v278 = vadd.f32 %v247, %v272
    %v279 = vsub.s32 %v19, 16
    %vm280 = vcmp.ge.s32.totalorder %v279, 0
    %vm281 = vcmp.lt.s32.totalorder %v279, 16
    %vm282 = vmand %vm280, %vm281
    %v283 = vsub.s32 %v279, 2
    %vm284 = vcmp.lt.s32.totalorder %v283, 0
    %v285 = vsub.s32 0, %v283
    %v286 = vsel %vm284, %v285, %v283
    %vm287 = vcmp.gt.s32.totalorder %v286, 15
    %v288 = vsub.s32 30, %v286
    %v289 = vsel %vm287, %v288, %v286
    %v290 = vadd.s32 %v289, 16
    %vm291 = vcmp.eq.s32.totalorder %v16, %v290
    %vm292 = vcmp.eq.s32.totalorder %v17, %v290
    %vm293 = vcmp.eq.s32.totalorder %v118, %v290
    %vm294 = vcmp.eq.s32.totalorder %v119, %v290
    %vm295 = vcmp.eq.s32.totalorder %v120, %v290
    %vm296 = vcmp.eq.s32.totalorder %v121, %v290
    %vm297 = vmand %vm282, %vm291
    %vm298 = vmand %vm282, %vm292
    %vm299 = vmand %vm282, %vm293
    %vm300 = vmand %vm282, %vm294
    %vm301 = vmand %vm282, %vm295
    %vm302 = vmand %vm282, %vm296
    %v303 = vsel %vm297, 0.15246914, 0.0
    %v304 = vsel %vm298, 0.15246914, 0.0
    %v305 = vsel %vm299, 0.15246914, 0.0
    %v306 = vsel %vm300, 0.15246914, 0.0
    %v307 = vsel %vm301, 0.15246914, 0.0
    %v308 = vsel %vm302, 0.15246914, 0.0
    %v309 = vadd.f32 %v273, %v303
    %v310 = vadd.f32 %v274, %v304
    %v311 = vadd.f32 %v275, %v305
    %v312 = vadd.f32 %v276, %v306
    %v313 = vadd.f32 %v277, %v307
    %v314 = vadd.f32 %v278, %v308
    %v315 = vadd.s32 %v283, 1
    %vm316 = vcmp.lt.s32.totalorder %v315, 0
    %v317 = vsub.s32 0, %v315
    %v318 = vsel %vm316, %v317, %v315
    %vm319 = vcmp.gt.s32.totalorder %v318, 15
    %v320 = vsub.s32 30, %v318
    %v321 = vsel %vm319, %v320, %v318
    %v322 = vadd.s32 %v321, 16
    %vm323 = vcmp.eq.s32.totalorder %v16, %v322
    %vm324 = vcmp.eq.s32.totalorder %v17, %v322
    %vm325 = vcmp.eq.s32.totalorder %v118, %v322
    %vm326 = vcmp.eq.s32.totalorder %v119, %v322
    %vm327 = vcmp.eq.s32.totalorder %v120, %v322
    %vm328 = vcmp.eq.s32.totalorder %v121, %v322
    %vm329 = vmand %vm282, %vm323
    %vm330 = vmand %vm282, %vm324
    %vm331 = vmand %vm282, %vm325
    %vm332 = vmand %vm282, %vm326
    %vm333 = vmand %vm282, %vm327
    %vm334 = vmand %vm282, %vm328
    %v335 = vsel %vm329, 0.22184129, 0.0
    %v336 = vsel %vm330, 0.22184129, 0.0
    %v337 = vsel %vm331, 0.22184129, 0.0
    %v338 = vsel %vm332, 0.22184129, 0.0
    %v339 = vsel %vm333, 0.22184129, 0.0
    %v340 = vsel %vm334, 0.22184129, 0.0
    %v341 = vadd.f32 %v309, %v335
    %v342 = vadd.f32 %v310, %v336
    %v343 = vadd.f32 %v311, %v337
    %v344 = vadd.f32 %v312, %v338
    %v345 = vadd.f32 %v313, %v339
    %v346 = vadd.f32 %v314, %v340
    %vm347 = vcmp.lt.s32.totalorder %v279, 0
    %v348 = vsub.s32 0, %v279
    %v349 = vsel %vm347, %v348, %v279
    %vm350 = vcmp.gt.s32.totalorder %v349, 15
    %v351 = vsub.s32 30, %v349
    %v352 = vsel %vm350, %v351, %v349
    %v353 = vadd.s32 %v352, 16
    %vm354 = vcmp.eq.s32.totalorder %v16, %v353
    %vm355 = vcmp.eq.s32.totalorder %v17, %v353
    %vm356 = vcmp.eq.s32.totalorder %v118, %v353
    %vm357 = vcmp.eq.s32.totalorder %v119, %v353
    %vm358 = vcmp.eq.s32.totalorder %v120, %v353
    %vm359 = vcmp.eq.s32.totalorder %v121, %v353
    %vm360 = vmand %vm282, %vm354
    %vm361 = vmand %vm282, %vm355
    %vm362 = vmand %vm282, %vm356
    %vm363 = vmand %vm282, %vm357
    %vm364 = vmand %vm282, %vm358
    %vm365 = vmand %vm282, %vm359
    %v366 = vsel %vm360, 0.25137913, 0.0
    %v367 = vsel %vm361, 0.25137913, 0.0
    %v368 = vsel %vm362, 0.25137913, 0.0
    %v369 = vsel %vm363, 0.25137913, 0.0
    %v370 = vsel %vm364, 0.25137913, 0.0
    %v371 = vsel %vm365, 0.25137913, 0.0
    %v372 = vadd.f32 %v341, %v366
    %v373 = vadd.f32 %v342, %v367
    %v374 = vadd.f32 %v343, %v368
    %v375 = vadd.f32 %v344, %v369
    %v376 = vadd.f32 %v345, %v370
    %v377 = vadd.f32 %v346, %v371
    %v378 = vadd.s32 %v283, 3
    %vm379 = vcmp.lt.s32.totalorder %v378, 0
    %v380 = vsub.s32 0, %v378
    %v381 = vsel %vm379, %v380, %v378
    %vm382 = vcmp.gt.s32.totalorder %v381, 15
    %v383 = vsub.s32 30, %v381
    %v384 = vsel %vm382, %v383, %v381
    %v385 = vadd.s32 %v384, 16
    %vm386 = vcmp.eq.s32.totalorder %v16, %v385
    %vm387 = vcmp.eq.s32.totalorder %v17, %v385
    %vm388 = vcmp.eq.s32.totalorder %v118, %v385
    %vm389 = vcmp.eq.s32.totalorder %v119, %v385
    %vm390 = vcmp.eq.s32.totalorder %v120, %v385
    %vm391 = vcmp.eq.s32.totalorder %v121, %v385
    %vm392 = vmand %vm282, %vm386
    %vm393 = vmand %vm282, %vm387
    %vm394 = vmand %vm282, %vm388
    %vm395 = vmand %vm282, %vm389
    %vm396 = vmand %vm282, %vm390
    %vm397 = vmand %vm282, %vm391
    %v398 = vsel %vm392, 0.22184129, 0.0
    %v399 = vsel %vm393, 0.22184129, 0.0
    %v400 = vsel %vm394, 0.22184129, 0.0
    %v401 = vsel %vm395, 0.22184129, 0.0
    %v402 = vsel %vm396, 0.22184129, 0.0
    %v403 = vsel %vm397, 0.22184129, 0.0
    %v404 = vadd.f32 %v372, %v398
    %v405 = vadd.f32 %v373, %v399
    %v406 = vadd.f32 %v374, %v400
    %v407 = vadd.f32 %v375, %v401
    %v408 = vadd.f32 %v376, %v402
    %v409 = vadd.f32 %v377, %v403
    %v410 = vadd.s32 %v283, 4
    %vm411 = vcmp.lt.s32.totalorder %v410, 0
    %v412 = vsub.s32 0, %v410
    %v413 = vsel %vm411, %v412, %v410
    %vm414 = vcmp.gt.s32.totalorder %v413, 15
    %v415 = vsub.s32 30, %v413
    %v416 = vsel %vm414, %v415, %v413
    %v417 = vadd.s32 %v416, 16
    %vm418 = vcmp.eq.s32.totalorder %v16, %v417
    %vm419 = vcmp.eq.s32.totalorder %v17, %v417
    %vm420 = vcmp.eq.s32.totalorder %v118, %v417
    %vm421 = vcmp.eq.s32.totalorder %v119, %v417
    %vm422 = vcmp.eq.s32.totalorder %v120, %v417
    %vm423 = vcmp.eq.s32.totalorder %v121, %v417
    %vm424 = vmand %vm282, %vm418
    %vm425 = vmand %vm282, %vm419
    %vm426 = vmand %vm282, %vm420
    %vm427 = vmand %vm282, %vm421
    %vm428 = vmand %vm282, %vm422
    %vm429 = vmand %vm282, %vm423
    %v430 = vsel %vm424, 0.15246914, 0.0
    %v431 = vsel %vm425, 0.15246914, 0.0
    %v432 = vsel %vm426, 0.15246914, 0.0
    %v433 = vsel %vm427, 0.15246914, 0.0
    %v434 = vsel %vm428, 0.15246914, 0.0
    %v435 = vsel %vm429, 0.15246914, 0.0
    %v436 = vadd.f32 %v404, %v430
    %v437 = vadd.f32 %v405, %v431
    %v438 = vadd.f32 %v406, %v432
    %v439 = vadd.f32 %v407, %v433
    %v440 = vadd.f32 %v408, %v434
    %v441 = vadd.f32 %v409, %v435
    %v442 = vsub.s32 %v19, 32
    %vm443 = vcmp.ge.s32.totalorder %v442, 0
    %vm444 = vcmp.lt.s32.totalorder %v442, 16
    %vm445 = vmand %vm443, %vm444
    %v446 = vsub.s32 %v442, 2
    %vm447 = vcmp.lt.s32.totalorder %v446, 0
    %v448 = vsub.s32 0, %v446
    %v449 = vsel %vm447, %v448, %v446
    %vm450 = vcmp.gt.s32.totalorder %v449, 15
    %v451 = vsub.s32 30, %v449
    %v452 = vsel %vm450, %v451, %v449
    %v453 = vadd.s32 %v452, 32
    %vm454 = vcmp.eq.s32.totalorder %v16, %v453
    %vm455 = vcmp.eq.s32.totalorder %v17, %v453
    %vm456 = vcmp.eq.s32.totalorder %v118, %v453
    %vm457 = vcmp.eq.s32.totalorder %v119, %v453
    %vm458 = vcmp.eq.s32.totalorder %v120, %v453
    %vm459 = vcmp.eq.s32.totalorder %v121, %v453
    %vm460 = vmand %vm445, %vm454
    %vm461 = vmand %vm445, %vm455
    %vm462 = vmand %vm445, %vm456
    %vm463 = vmand %vm445, %vm457
    %vm464 = vmand %vm445, %vm458
    %vm465 = vmand %vm445, %vm459
    %v466 = vsel %vm460, 0.15246914, 0.0
    %v467 = vsel %vm461, 0.15246914, 0.0
    %v468 = vsel %vm462, 0.15246914, 0.0
    %v469 = vsel %vm463, 0.15246914, 0.0
    %v470 = vsel %vm464, 0.15246914, 0.0
    %v471 = vsel %vm465, 0.15246914, 0.0
    %v472 = vadd.f32 %v436, %v466
    %v473 = vadd.f32 %v437, %v467
    %v474 = vadd.f32 %v438, %v468
    %v475 = vadd.f32 %v439, %v469
    %v476 = vadd.f32 %v440, %v470
    %v477 = vadd.f32 %v441, %v471
    %v478 = vadd.s32 %v446, 1
    %vm479 = vcmp.lt.s32.totalorder %v478, 0
    %v480 = vsub.s32 0, %v478
    %v481 = vsel %vm479, %v480, %v478
    %vm482 = vcmp.gt.s32.totalorder %v481, 15
    %v483 = vsub.s32 30, %v481
    %v484 = vsel %vm482, %v483, %v481
    %v485 = vadd.s32 %v484, 32
    %vm486 = vcmp.eq.s32.totalorder %v16, %v485
    %vm487 = vcmp.eq.s32.totalorder %v17, %v485
    %vm488 = vcmp.eq.s32.totalorder %v118, %v485
    %vm489 = vcmp.eq.s32.totalorder %v119, %v485
    %vm490 = vcmp.eq.s32.totalorder %v120, %v485
    %vm491 = vcmp.eq.s32.totalorder %v121, %v485
    %vm492 = vmand %vm445, %vm486
    %vm493 = vmand %vm445, %vm487
    %vm494 = vmand %vm445, %vm488
    %vm495 = vmand %vm445, %vm489
    %vm496 = vmand %vm445, %vm490
    %vm497 = vmand %vm445, %vm491
    %v498 = vsel %vm492, 0.22184129, 0.0
    %v499 = vsel %vm493, 0.22184129, 0.0
    %v500 = vsel %vm494, 0.22184129, 0.0
    %v501 = vsel %vm495, 0.22184129, 0.0
    %v502 = vsel %vm496, 0.22184129, 0.0
    %v503 = vsel %vm497, 0.22184129, 0.0
    %v504 = vadd.f32 %v472, %v498
    %v505 = vadd.f32 %v473, %v499
    %v506 = vadd.f32 %v474, %v500
    %v507 = vadd.f32 %v475, %v501
    %v508 = vadd.f32 %v476, %v502
    %v509 = vadd.f32 %v477, %v503
    %vm510 = vcmp.lt.s32.totalorder %v442, 0
    %v511 = vsub.s32 0, %v442
    %v512 = vsel %vm510, %v511, %v442
    %vm513 = vcmp.gt.s32.totalorder %v512, 15
    %v514 = vsub.s32 30, %v512
    %v515 = vsel %vm513, %v514, %v512
    %v516 = vadd.s32 %v515, 32
    %vm517 = vcmp.eq.s32.totalorder %v16, %v516
    %vm518 = vcmp.eq.s32.totalorder %v17, %v516
    %vm519 = vcmp.eq.s32.totalorder %v118, %v516
    %vm520 = vcmp.eq.s32.totalorder %v119, %v516
    %vm521 = vcmp.eq.s32.totalorder %v120, %v516
    %vm522 = vcmp.eq.s32.totalorder %v121, %v516
    %vm523 = vmand %vm445, %vm517
    %vm524 = vmand %vm445, %vm518
    %vm525 = vmand %vm445, %vm519
    %vm526 = vmand %vm445, %vm520
    %vm527 = vmand %vm445, %vm521
    %vm528 = vmand %vm445, %vm522
    %v529 = vsel %vm523, 0.25137913, 0.0
    %v530 = vsel %vm524, 0.25137913, 0.0
    %v531 = vsel %vm525, 0.25137913, 0.0
    %v532 = vsel %vm526, 0.25137913, 0.0
    %v533 = vsel %vm527, 0.25137913, 0.0
    %v534 = vsel %vm528, 0.25137913, 0.0
    %v535 = vadd.f32 %v504, %v529
    %v536 = vadd.f32 %v505, %v530
    %v537 = vadd.f32 %v506, %v531
    %v538 = vadd.f32 %v507, %v532
    %v539 = vadd.f32 %v508, %v533
    %v540 = vadd.f32 %v509, %v534
    %v541 = vadd.s32 %v446, 3
    %vm542 = vcmp.lt.s32.totalorder %v541, 0
    %v543 = vsub.s32 0, %v541
    %v544 = vsel %vm542, %v543, %v541
    %vm545 = vcmp.gt.s32.totalorder %v544, 15
    %v546 = vsub.s32 30, %v544
    %v547 = vsel %vm545, %v546, %v544
    %v548 = vadd.s32 %v547, 32
    %vm549 = vcmp.eq.s32.totalorder %v16, %v548
    %vm550 = vcmp.eq.s32.totalorder %v17, %v548
    %vm551 = vcmp.eq.s32.totalorder %v118, %v548
    %vm552 = vcmp.eq.s32.totalorder %v119, %v548
    %vm553 = vcmp.eq.s32.totalorder %v120, %v548
    %vm554 = vcmp.eq.s32.totalorder %v121, %v548
    %vm555 = vmand %vm445, %vm549
    %vm556 = vmand %vm445, %vm550
    %vm557 = vmand %vm445, %vm551
    %vm558 = vmand %vm445, %vm552
    %vm559 = vmand %vm445, %vm553
    %vm560 = vmand %vm445, %vm554
    %v561 = vsel %vm555, 0.22184129, 0.0
    %v562 = vsel %vm556, 0.22184129, 0.0
    %v563 = vsel %vm557, 0.22184129, 0.0
    %v564 = vsel %vm558, 0.22184129, 0.0
    %v565 = vsel %vm559, 0.22184129, 0.0
    %v566 = vsel %vm560, 0.22184129, 0.0
    %v567 = vadd.f32 %v535, %v561
    %v568 = vadd.f32 %v536, %v562
    %v569 = vadd.f32 %v537, %v563
    %v570 = vadd.f32 %v538, %v564
    %v571 = vadd.f32 %v539, %v565
    %v572 = vadd.f32 %v540, %v566
    %v573 = vadd.s32 %v446, 4
    %vm574 = vcmp.lt.s32.totalorder %v573, 0
    %v575 = vsub.s32 0, %v573
    %v576 = vsel %vm574, %v575, %v573
    %vm577 = vcmp.gt.s32.totalorder %v576, 15
    %v578 = vsub.s32 30, %v576
    %v579 = vsel %vm577, %v578, %v576
    %v580 = vadd.s32 %v579, 32
    %vm581 = vcmp.eq.s32.totalorder %v16, %v580
    %vm582 = vcmp.eq.s32.totalorder %v17, %v580
    %vm583 = vcmp.eq.s32.totalorder %v118, %v580
    %vm584 = vcmp.eq.s32.totalorder %v119, %v580
    %vm585 = vcmp.eq.s32.totalorder %v120, %v580
    %vm586 = vcmp.eq.s32.totalorder %v121, %v580
    %vm587 = vmand %vm445, %vm581
    %vm588 = vmand %vm445, %vm582
    %vm589 = vmand %vm445, %vm583
    %vm590 = vmand %vm445, %vm584
    %vm591 = vmand %vm445, %vm585
    %vm592 = vmand %vm445, %vm586
    %v593 = vsel %vm587, 0.15246914, 0.0
    %v594 = vsel %vm588, 0.15246914, 0.0
    %v595 = vsel %vm589, 0.15246914, 0.0
    %v596 = vsel %vm590, 0.15246914, 0.0
    %v597 = vsel %vm591, 0.15246914, 0.0
    %v598 = vsel %vm592, 0.15246914, 0.0
    %v599 = vadd.f32 %v567, %v593
    %v600 = vadd.f32 %v568, %v594
    %v601 = vadd.f32 %v569, %v595
    %v602 = vadd.f32 %v570, %v596
    %v603 = vadd.f32 %v571, %v597
    %v604 = vadd.f32 %v572, %v598
    %v605 = vld [vmem:[%s0] sm:$0xff]
    %v606 = vld [vmem:[%s0 + $0x8] sm:$0xff]
    %vm607 = vcmask 392192
    %v609 = vsel %vm607, %v605, 0
    %v612 = vsel %vm607, %v606, 0
    %614 = vmatprep.subr.mxu0 0.0
    %v615 = vand.u32 %v599, 4294901760
    %616 = vmatpush1.msra.mxu0 %v615
    %617 = vmatprep.subr.mxu0 0.0
    %v618 = vand.u32 %v600, 4294901760
    %619 = vmatpush1.msra.mxu0 %v618
    %620 = vmatprep.subr.mxu0 0.0
    %v621 = vand.u32 %v601, 4294901760
    %622 = vmatpush1.msra.mxu0 %v621
    %623 = vmatprep.subr.mxu0 0.0
    %v624 = vand.u32 %v602, 4294901760
    %625 = vmatpush1.msra.mxu0 %v624
    %626 = vmatprep.subr.mxu0 0.0
    %v627 = vand.u32 %v603, 4294901760
    %628 = vmatpush1.msra.mxu0 %v627
    %629 = vmatprep.subr.mxu0 0.0
    %v630 = vand.u32 %v604, 4294901760
    %631 = vmatpush1.msra.mxu0 %v630
    %632 = vmatprep.subr.mxu0 0.0
    %633 = vmatpush1.msra.mxu0 0.0
    %634 = vmatprep.subr.mxu0 0.0
    %635 = vmatpush1.msra.mxu0 0.0
    %636 = vmatprep.subr.mxu0 0.0
    %637 = vmatpush1.msra.mxu0 0.0
    %638 = vmatprep.subr.mxu0 0.0
    %639 = vmatpush1.msra.mxu0 0.0
    %640 = vmatprep.subr.mxu0 0.0
    %641 = vmatpush1.msra.mxu0 0.0
    %642 = vmatprep.subr.mxu0 0.0
    %643 = vmatpush1.msra.mxu0 0.0
    %644 = vmatprep.subr.mxu0 0.0
    %645 = vmatpush1.msra.mxu0 0.0
    %646 = vmatprep.subr.mxu0 0.0
    %647 = vmatpush1.msra.mxu0 0.0
    %648 = vmatprep.subr.mxu0 0.0
    %649 = vmatpush1.msra.mxu0 0.0
    %650 = vmatprep.subr.mxu0 0.0
    %651 = vmatpush1.msra.mxu0 0.0
    %652 = vmatprep.subr.mxu0 0.0
    %653 = vmatpush1.msra.mxu0 0.0
    %654 = vmatprep.subr.mxu0 0.0
    %655 = vmatpush1.msra.mxu0 0.0
    %656 = vmatprep.subr.mxu0 0.0
    %657 = vmatpush1.msra.mxu0 0.0
    %658 = vmatprep.subr.mxu0 0.0
    %659 = vmatpush1.msra.mxu0 0.0
    %660 = vmatprep.subr.mxu0 0.0
    %661 = vmatpush1.msra.mxu0 0.0
    %662 = vmatprep.subr.mxu0 0.0
    %663 = vmatpush1.msra.mxu0 0.0
    %664 = vmatprep.subr.mxu0 0.0
    %665 = vmatpush1.msra.mxu0 0.0
    %666 = vmatprep.subr.mxu0 0.0
    %667 = vmatpush1.msra.mxu0 0.0
    %668 = vmatprep.subr.mxu0 0.0
    %669 = vmatpush1.msra.mxu0 0.0
    %670 = vmatprep.subr.mxu0 0.0
    %671 = vmatpush1.msra.mxu0 0.0
    %672 = vmatprep.subr.mxu0 0.0
    %673 = vmatpush1.msra.mxu0 0.0
    %674 = vmatprep.subr.mxu0 0.0
    %675 = vmatpush1.msra.mxu0 0.0
    %676 = vmatprep.subr.mxu0 0.0
    %677 = vmatpush1.msra.mxu0 0.0
    %678 = vmatprep.subr.mxu0 0.0
    %679 = vmatpush1.msra.mxu0 0.0
    %680 = vmatprep.subr.mxu0 0.0
    %681 = vmatpush1.msra.mxu0 0.0
    %682 = vmatprep.subr.mxu0 0.0
    %683 = vmatpush1.msra.mxu0 0.0
    %684 = vmatprep.mubr.f32.mxu0 0.0
    %v685 = vand.u32 %v609, 4294901760
    %v686 = vsub.f32 %v609, %v685
    %v687 = vand.u32 %v686, 4294901760
    %v688 = vsub.f32 %v686, %v687
    %v689 = vand.u32 %v688, 4294901760
    %690 = vmatmul.mubr.f32.gmra.mrb[0].mxu0 %v689
    %v691 = vpop.f32.mrb[0].mxu0
    %v692 = vadd.f32 0.0, %v691
    %v693 = vpop.f32.mrb[0].mxu0
    %694 = vmatprep.mubr.f32.mxu0 0.0
    %v695 = vand.u32 %v612, 4294901760
    %v696 = vsub.f32 %v612, %v695
    %v697 = vand.u32 %v696, 4294901760
    %v698 = vsub.f32 %v696, %v697
    %v699 = vand.u32 %v698, 4294901760
    %700 = vmatmul.mubr.f32.gmra.mrb[0].mxu0 %v699
    %v701 = vpop.f32.mrb[0].mxu0
    %v702 = vadd.f32 0.0, %v701
    %v703 = vpop.f32.mrb[0].mxu0
    %704 = vdwg.mxu0
    %705 = vmatprep.subr.mxu0 0.0
    %v706 = vand.u32 %v599, 4294901760
    %v707 = vsub.f32 %v599, %v706
    %v708 = vand.u32 %v707, 4294901760
    %v709 = vsub.f32 %v707, %v708
    %v710 = vand.u32 %v709, 4294901760
    %711 = vmatpush1.msra.mxu0 %v710
    %712 = vmatprep.subr.mxu0 0.0
    %v713 = vand.u32 %v600, 4294901760
    %v714 = vsub.f32 %v600, %v713
    %v715 = vand.u32 %v714, 4294901760
    %v716 = vsub.f32 %v714, %v715
    %v717 = vand.u32 %v716, 4294901760
    %718 = vmatpush1.msra.mxu0 %v717
    %719 = vmatprep.subr.mxu0 0.0
    %v720 = vand.u32 %v601, 4294901760
    %v721 = vsub.f32 %v601, %v720
    %v722 = vand.u32 %v721, 4294901760
    %v723 = vsub.f32 %v721, %v722
    %v724 = vand.u32 %v723, 4294901760
    %725 = vmatpush1.msra.mxu0 %v724
    %726 = vmatprep.subr.mxu0 0.0
    %v727 = vand.u32 %v602, 4294901760
    %v728 = vsub.f32 %v602, %v727
    %v729 = vand.u32 %v728, 4294901760
    %v730 = vsub.f32 %v728, %v729
    %v731 = vand.u32 %v730, 4294901760
    %732 = vmatpush1.msra.mxu0 %v731
    %733 = vmatprep.subr.mxu0 0.0
    %v734 = vand.u32 %v603, 4294901760
    %v735 = vsub.f32 %v603, %v734
    %v736 = vand.u32 %v735, 4294901760
    %v737 = vsub.f32 %v735, %v736
    %v738 = vand.u32 %v737, 4294901760
    %739 = vmatpush1.msra.mxu0 %v738
    %740 = vmatprep.subr.mxu0 0.0
    %v741 = vand.u32 %v604, 4294901760
    %v742 = vsub.f32 %v604, %v741
    %v743 = vand.u32 %v742, 4294901760
    %v744 = vsub.f32 %v742, %v743
    %v745 = vand.u32 %v744, 4294901760
    %746 = vmatpush1.msra.mxu0 %v745
    %747 = vmatprep.subr.mxu0 0.0
    %748 = vmatpush1.msra.mxu0 0.0
    %749 = vmatprep.subr.mxu0 0.0
    %750 = vmatpush1.msra.mxu0 0.0
    %751 = vmatprep.subr.mxu0 0.0
    %752 = vmatpush1.msra.mxu0 0.0
    %753 = vmatprep.subr.mxu0 0.0
    %754 = vmatpush1.msra.mxu0 0.0
    %755 = vmatprep.subr.mxu0 0.0
    %756 = vmatpush1.msra.mxu0 0.0
    %757 = vmatprep.subr.mxu0 0.0
    %758 = vmatpush1.msra.mxu0 0.0
    %759 = vmatprep.subr.mxu0 0.0
    %760 = vmatpush1.msra.mxu0 0.0
    %761 = vmatprep.subr.mxu0 0.0
    %762 = vmatpush1.msra.mxu0 0.0
    %763 = vmatprep.subr.mxu0 0.0
    %764 = vmatpush1.msra.mxu0 0.0
    %765 = vmatprep.subr.mxu0 0.0
    %766 = vmatpush1.msra.mxu0 0.0
    %767 = vmatprep.subr.mxu0 0.0
    %768 = vmatpush1.msra.mxu0 0.0
    %769 = vmatprep.subr.mxu0 0.0
    %770 = vmatpush1.msra.mxu0 0.0
    %771 = vmatprep.subr.mxu0 0.0
    %772 = vmatpush1.msra.mxu0 0.0
    %773 = vmatprep.subr.mxu0 0.0
    %774 = vmatpush1.msra.mxu0 0.0
    %775 = vmatprep.subr.mxu0 0.0
    %776 = vmatpush1.msra.mxu0 0.0
    %777 = vmatprep.subr.mxu0 0.0
    %778 = vmatpush1.msra.mxu0 0.0
    %779 = vmatprep.subr.mxu0 0.0
    %780 = vmatpush1.msra.mxu0 0.0
    %781 = vmatprep.subr.mxu0 0.0
    %782 = vmatpush1.msra.mxu0 0.0
    %783 = vmatprep.subr.mxu0 0.0
    %784 = vmatpush1.msra.mxu0 0.0
    %785 = vmatprep.subr.mxu0 0.0
    %786 = vmatpush1.msra.mxu0 0.0
    %787 = vmatprep.subr.mxu0 0.0
    %788 = vmatpush1.msra.mxu0 0.0
    %789 = vmatprep.subr.mxu0 0.0
    %790 = vmatpush1.msra.mxu0 0.0
    %791 = vmatprep.subr.mxu0 0.0
    %792 = vmatpush1.msra.mxu0 0.0
    %793 = vmatprep.subr.mxu0 0.0
    %794 = vmatpush1.msra.mxu0 0.0
    %795 = vmatprep.subr.mxu0 0.0
    %796 = vmatpush1.msra.mxu0 0.0
    %797 = vmatprep.subr.mxu0 0.0
    %798 = vmatpush1.msra.mxu0 0.0
    %799 = vmatprep.mubr.f32.mxu0 0.0
    %v800 = vand.u32 %v609, 4294901760
    %801 = vmatmul.mubr.f32.gmra.mrb[0].mxu0 %v800
    %v802 = vpop.f32.mrb[0].mxu0
    %v803 = vadd.f32 %v692, %v802
    %v804 = vpop.f32.mrb[0].mxu0
    %805 = vmatprep.mubr.f32.mxu0 0.0
    %v806 = vand.u32 %v612, 4294901760
    %807 = vmatmul.mubr.f32.gmra.mrb[0].mxu0 %v806
    %v808 = vpop.f32.mrb[0].mxu0
    %v809 = vadd.f32 %v702, %v808
    %v810 = vpop.f32.mrb[0].mxu0
    %811 = vdwg.mxu0
    %812 = vmatprep.subr.mxu0 0.0
    %v813 = vand.u32 %v599, 4294901760
    %v814 = vsub.f32 %v599, %v813
    %815 = vmatpush1.msra.mxu0 %v814
    %816 = vmatprep.subr.mxu0 0.0
    %v817 = vand.u32 %v600, 4294901760
    %v818 = vsub.f32 %v600, %v817
    %819 = vmatpush1.msra.mxu0 %v818
    %820 = vmatprep.subr.mxu0 0.0
    %v821 = vand.u32 %v601, 4294901760
    %v822 = vsub.f32 %v601, %v821
    %823 = vmatpush1.msra.mxu0 %v822
    %824 = vmatprep.subr.mxu0 0.0
    %v825 = vand.u32 %v602, 4294901760
    %v826 = vsub.f32 %v602, %v825
    %827 = vmatpush1.msra.mxu0 %v826
    %828 = vmatprep.subr.mxu0 0.0
    %v829 = vand.u32 %v603, 4294901760
    %v830 = vsub.f32 %v603, %v829
    %831 = vmatpush1.msra.mxu0 %v830
    %832 = vmatprep.subr.mxu0 0.0
    %v833 = vand.u32 %v604, 4294901760
    %v834 = vsub.f32 %v604, %v833
    %835 = vmatpush1.msra.mxu0 %v834
    %836 = vmatprep.subr.mxu0 0.0
    %837 = vmatpush1.msra.mxu0 0.0
    %838 = vmatprep.subr.mxu0 0.0
    %839 = vmatpush1.msra.mxu0 0.0
    %840 = vmatprep.subr.mxu0 0.0
    %841 = vmatpush1.msra.mxu0 0.0
    %842 = vmatprep.subr.mxu0 0.0
    %843 = vmatpush1.msra.mxu0 0.0
    %844 = vmatprep.subr.mxu0 0.0
    %845 = vmatpush1.msra.mxu0 0.0
    %846 = vmatprep.subr.mxu0 0.0
    %847 = vmatpush1.msra.mxu0 0.0
    %848 = vmatprep.subr.mxu0 0.0
    %849 = vmatpush1.msra.mxu0 0.0
    %850 = vmatprep.subr.mxu0 0.0
    %851 = vmatpush1.msra.mxu0 0.0
    %852 = vmatprep.subr.mxu0 0.0
    %853 = vmatpush1.msra.mxu0 0.0
    %854 = vmatprep.subr.mxu0 0.0
    %855 = vmatpush1.msra.mxu0 0.0
    %856 = vmatprep.subr.mxu0 0.0
    %857 = vmatpush1.msra.mxu0 0.0
    %858 = vmatprep.subr.mxu0 0.0
    %859 = vmatpush1.msra.mxu0 0.0
    %860 = vmatprep.subr.mxu0 0.0
    %861 = vmatpush1.msra.mxu0 0.0
    %862 = vmatprep.subr.mxu0 0.0
    %863 = vmatpush1.msra.mxu0 0.0
    %864 = vmatprep.subr.mxu0 0.0
    %865 = vmatpush1.msra.mxu0 0.0
    %866 = vmatprep.subr.mxu0 0.0
    %867 = vmatpush1.msra.mxu0 0.0
    %868 = vmatprep.subr.mxu0 0.0
    %869 = vmatpush1.msra.mxu0 0.0
    %870 = vmatprep.subr.mxu0 0.0
    %871 = vmatpush1.msra.mxu0 0.0
    %872 = vmatprep.subr.mxu0 0.0
    %873 = vmatpush1.msra.mxu0 0.0
    %874 = vmatprep.subr.mxu0 0.0
    %875 = vmatpush1.msra.mxu0 0.0
    %876 = vmatprep.subr.mxu0 0.0
    %877 = vmatpush1.msra.mxu0 0.0
    %878 = vmatprep.subr.mxu0 0.0
    %879 = vmatpush1.msra.mxu0 0.0
    %880 = vmatprep.subr.mxu0 0.0
    %881 = vmatpush1.msra.mxu0 0.0
    %882 = vmatprep.subr.mxu0 0.0
    %883 = vmatpush1.msra.mxu0 0.0
    %884 = vmatprep.subr.mxu0 0.0
    %885 = vmatpush1.msra.mxu0 0.0
    %886 = vmatprep.subr.mxu0 0.0
    %887 = vmatpush1.msra.mxu0 0.0
    %888 = vmatprep.mubr.f32.mxu0 0.0
    %v889 = vand.u32 %v609, 4294901760
    %v890 = vsub.f32 %v609, %v889
    %891 = vmatmul.mubr.f32.gmra.mrb[0].mxu0 %v890
    %v892 = vpop.f32.mrb[0].mxu0
    %v893 = vadd.f32 %v803, %v892
    %v894 = vpop.f32.mrb[0].mxu0
    %895 = vmatprep.mubr.f32.mxu0 0.0
    %v896 = vand.u32 %v612, 4294901760
    %v897 = vsub.f32 %v612, %v896
    %898 = vmatmul.mubr.f32.gmra.mrb[0].mxu0 %v897
    %v899 = vpop.f32.mrb[0].mxu0
    %v900 = vadd.f32 %v809, %v899
    %v901 = vpop.f32.mrb[0].mxu0
    %902 = vdwg.mxu0
    %903 = vmatprep.subr.mxu0 0.0
    %v904 = vand.u32 %v599, 4294901760
    %905 = vmatpush1.msra.mxu0 %v904
    %906 = vmatprep.subr.mxu0 0.0
    %v907 = vand.u32 %v600, 4294901760
    %908 = vmatpush1.msra.mxu0 %v907
    %909 = vmatprep.subr.mxu0 0.0
    %v910 = vand.u32 %v601, 4294901760
    %911 = vmatpush1.msra.mxu0 %v910
    %912 = vmatprep.subr.mxu0 0.0
    %v913 = vand.u32 %v602, 4294901760
    %914 = vmatpush1.msra.mxu0 %v913
    %915 = vmatprep.subr.mxu0 0.0
    %v916 = vand.u32 %v603, 4294901760
    %917 = vmatpush1.msra.mxu0 %v916
    %918 = vmatprep.subr.mxu0 0.0
    %v919 = vand.u32 %v604, 4294901760
    %920 = vmatpush1.msra.mxu0 %v919
    %921 = vmatprep.subr.mxu0 0.0
    %922 = vmatpush1.msra.mxu0 0.0
    %923 = vmatprep.subr.mxu0 0.0
    %924 = vmatpush1.msra.mxu0 0.0
    %925 = vmatprep.subr.mxu0 0.0
    %926 = vmatpush1.msra.mxu0 0.0
    %927 = vmatprep.subr.mxu0 0.0
    %928 = vmatpush1.msra.mxu0 0.0
    %929 = vmatprep.subr.mxu0 0.0
    %930 = vmatpush1.msra.mxu0 0.0
    %931 = vmatprep.subr.mxu0 0.0
    %932 = vmatpush1.msra.mxu0 0.0
    %933 = vmatprep.subr.mxu0 0.0
    %934 = vmatpush1.msra.mxu0 0.0
    %935 = vmatprep.subr.mxu0 0.0
    %936 = vmatpush1.msra.mxu0 0.0
    %937 = vmatprep.subr.mxu0 0.0
    %938 = vmatpush1.msra.mxu0 0.0
    %939 = vmatprep.subr.mxu0 0.0
    %940 = vmatpush1.msra.mxu0 0.0
    %941 = vmatprep.subr.mxu0 0.0
    %942 = vmatpush1.msra.mxu0 0.0
    %943 = vmatprep.subr.mxu0 0.0
    %944 = vmatpush1.msra.mxu0 0.0
    %945 = vmatprep.subr.mxu0 0.0
    %946 = vmatpush1.msra.mxu0 0.0
    %947 = vmatprep.subr.mxu0 0.0
    %948 = vmatpush1.msra.mxu0 0.0
    %949 = vmatprep.subr.mxu0 0.0
    %950 = vmatpush1.msra.mxu0 0.0
    %951 = vmatprep.subr.mxu0 0.0
    %952 = vmatpush1.msra.mxu0 0.0
    %953 = vmatprep.subr.mxu0 0.0
    %954 = vmatpush1.msra.mxu0 0.0
    %955 = vmatprep.subr.mxu0 0.0
    %956 = vmatpush1.msra.mxu0 0.0
    %957 = vmatprep.subr.mxu0 0.0
    %958 = vmatpush1.msra.mxu0 0.0
    %959 = vmatprep.subr.mxu0 0.0
    %960 = vmatpush1.msra.mxu0 0.0
    %961 = vmatprep.subr.mxu0 0.0
    %962 = vmatpush1.msra.mxu0 0.0
    %963 = vmatprep.subr.mxu0 0.0
    %964 = vmatpush1.msra.mxu0 0.0
    %965 = vmatprep.subr.mxu0 0.0
    %966 = vmatpush1.msra.mxu0 0.0
    %967 = vmatprep.subr.mxu0 0.0
    %968 = vmatpush1.msra.mxu0 0.0
    %969 = vmatprep.subr.mxu0 0.0
    %970 = vmatpush1.msra.mxu0 0.0
    %971 = vmatprep.subr.mxu0 0.0
    %972 = vmatpush1.msra.mxu0 0.0
    %973 = vmatprep.mubr.f32.mxu0 0.0
    %v974 = vand.u32 %v609, 4294901760
    %v975 = vsub.f32 %v609, %v974
    %v976 = vand.u32 %v975, 4294901760
    %977 = vmatmul.mubr.f32.gmra.mrb[0].mxu0 %v976
    %v978 = vpop.f32.mrb[0].mxu0
    %v979 = vadd.f32 %v893, %v978
    %v980 = vpop.f32.mrb[0].mxu0
    %981 = vmatprep.mubr.f32.mxu0 0.0
    %v982 = vand.u32 %v612, 4294901760
    %v983 = vsub.f32 %v612, %v982
    %v984 = vand.u32 %v983, 4294901760
    %985 = vmatmul.mubr.f32.gmra.mrb[0].mxu0 %v984
    %v986 = vpop.f32.mrb[0].mxu0
    %v987 = vadd.f32 %v900, %v986
    %v988 = vpop.f32.mrb[0].mxu0
    %989 = vdwg.mxu0
    %990 = vmatprep.subr.mxu0 0.0
    %v991 = vand.u32 %v599, 4294901760
    %v992 = vsub.f32 %v599, %v991
    %v993 = vand.u32 %v992, 4294901760
    %994 = vmatpush1.msra.mxu0 %v993
    %995 = vmatprep.subr.mxu0 0.0
    %v996 = vand.u32 %v600, 4294901760
    %v997 = vsub.f32 %v600, %v996
    %v998 = vand.u32 %v997, 4294901760
    %999 = vmatpush1.msra.mxu0 %v998
    %1000 = vmatprep.subr.mxu0 0.0
    %v1001 = vand.u32 %v601, 4294901760
    %v1002 = vsub.f32 %v601, %v1001
    %v1003 = vand.u32 %v1002, 4294901760
    %1004 = vmatpush1.msra.mxu0 %v1003
    %1005 = vmatprep.subr.mxu0 0.0
    %v1006 = vand.u32 %v602, 4294901760
    %v1007 = vsub.f32 %v602, %v1006
    %v1008 = vand.u32 %v1007, 4294901760
    %1009 = vmatpush1.msra.mxu0 %v1008
    %1010 = vmatprep.subr.mxu0 0.0
    %v1011 = vand.u32 %v603, 4294901760
    %v1012 = vsub.f32 %v603, %v1011
    %v1013 = vand.u32 %v1012, 4294901760
    %1014 = vmatpush1.msra.mxu0 %v1013
    %1015 = vmatprep.subr.mxu0 0.0
    %v1016 = vand.u32 %v604, 4294901760
    %v1017 = vsub.f32 %v604, %v1016
    %v1018 = vand.u32 %v1017, 4294901760
    %1019 = vmatpush1.msra.mxu0 %v1018
    %1020 = vmatprep.subr.mxu0 0.0
    %1021 = vmatpush1.msra.mxu0 0.0
    %1022 = vmatprep.subr.mxu0 0.0
    %1023 = vmatpush1.msra.mxu0 0.0
    %1024 = vmatprep.subr.mxu0 0.0
    %1025 = vmatpush1.msra.mxu0 0.0
    %1026 = vmatprep.subr.mxu0 0.0
    %1027 = vmatpush1.msra.mxu0 0.0
    %1028 = vmatprep.subr.mxu0 0.0
    %1029 = vmatpush1.msra.mxu0 0.0
    %1030 = vmatprep.subr.mxu0 0.0
    %1031 = vmatpush1.msra.mxu0 0.0
    %1032 = vmatprep.subr.mxu0 0.0
    %1033 = vmatpush1.msra.mxu0 0.0
    %1034 = vmatprep.subr.mxu0 0.0
    %1035 = vmatpush1.msra.mxu0 0.0
    %1036 = vmatprep.subr.mxu0 0.0
    %1037 = vmatpush1.msra.mxu0 0.0
    %1038 = vmatprep.subr.mxu0 0.0
    %1039 = vmatpush1.msra.mxu0 0.0
    %1040 = vmatprep.subr.mxu0 0.0
    %1041 = vmatpush1.msra.mxu0 0.0
    %1042 = vmatprep.subr.mxu0 0.0
    %1043 = vmatpush1.msra.mxu0 0.0
    %1044 = vmatprep.subr.mxu0 0.0
    %1045 = vmatpush1.msra.mxu0 0.0
    %1046 = vmatprep.subr.mxu0 0.0
    %1047 = vmatpush1.msra.mxu0 0.0
    %1048 = vmatprep.subr.mxu0 0.0
    %1049 = vmatpush1.msra.mxu0 0.0
    %1050 = vmatprep.subr.mxu0 0.0
    %1051 = vmatpush1.msra.mxu0 0.0
    %1052 = vmatprep.subr.mxu0 0.0
    %1053 = vmatpush1.msra.mxu0 0.0
    %1054 = vmatprep.subr.mxu0 0.0
    %1055 = vmatpush1.msra.mxu0 0.0
    %1056 = vmatprep.subr.mxu0 0.0
    %1057 = vmatpush1.msra.mxu0 0.0
    %1058 = vmatprep.subr.mxu0 0.0
    %1059 = vmatpush1.msra.mxu0 0.0
    %1060 = vmatprep.subr.mxu0 0.0
    %1061 = vmatpush1.msra.mxu0 0.0
    %1062 = vmatprep.subr.mxu0 0.0
    %1063 = vmatpush1.msra.mxu0 0.0
    %1064 = vmatprep.subr.mxu0 0.0
    %1065 = vmatpush1.msra.mxu0 0.0
    %1066 = vmatprep.subr.mxu0 0.0
    %1067 = vmatpush1.msra.mxu0 0.0
    %1068 = vmatprep.subr.mxu0 0.0
    %1069 = vmatpush1.msra.mxu0 0.0
    %1070 = vmatprep.subr.mxu0 0.0
    %1071 = vmatpush1.msra.mxu0 0.0
    %1072 = vmatprep.mubr.f32.mxu0 0.0
    %v1073 = vand.u32 %v609, 4294901760
    %1074 = vmatmul.mubr.f32.gmra.mrb[0].mxu0 %v1073
    %v1075 = vpop.f32.mrb[0].mxu0
    %v1076 = vadd.f32 %v979, %v1075
    %v1077 = vpop.f32.mrb[0].mxu0
    %1078 = vmatprep.mubr.f32.mxu0 0.0
    %v1079 = vand.u32 %v612, 4294901760
    %1080 = vmatmul.mubr.f32.gmra.mrb[0].mxu0 %v1079
    %v1081 = vpop.f32.mrb[0].mxu0
    %v1082 = vadd.f32 %v987, %v1081
    %v1083 = vpop.f32.mrb[0].mxu0
    %1084 = vdwg.mxu0
    %1085 = vmatprep.subr.mxu0 0.0
    %v1086 = vand.u32 %v599, 4294901760
    %1087 = vmatpush1.msra.mxu0 %v1086
    %1088 = vmatprep.subr.mxu0 0.0
    %v1089 = vand.u32 %v600, 4294901760
    %1090 = vmatpush1.msra.mxu0 %v1089
    %1091 = vmatprep.subr.mxu0 0.0
    %v1092 = vand.u32 %v601, 4294901760
    %1093 = vmatpush1.msra.mxu0 %v1092
    %1094 = vmatprep.subr.mxu0 0.0
    %v1095 = vand.u32 %v602, 4294901760
    %1096 = vmatpush1.msra.mxu0 %v1095
    %1097 = vmatprep.subr.mxu0 0.0
    %v1098 = vand.u32 %v603, 4294901760
    %1099 = vmatpush1.msra.mxu0 %v1098
    %1100 = vmatprep.subr.mxu0 0.0
    %v1101 = vand.u32 %v604, 4294901760
    %1102 = vmatpush1.msra.mxu0 %v1101
    %1103 = vmatprep.subr.mxu0 0.0
    %1104 = vmatpush1.msra.mxu0 0.0
    %1105 = vmatprep.subr.mxu0 0.0
    %1106 = vmatpush1.msra.mxu0 0.0
    %1107 = vmatprep.subr.mxu0 0.0
    %1108 = vmatpush1.msra.mxu0 0.0
    %1109 = vmatprep.subr.mxu0 0.0
    %1110 = vmatpush1.msra.mxu0 0.0
    %1111 = vmatprep.subr.mxu0 0.0
    %1112 = vmatpush1.msra.mxu0 0.0
    %1113 = vmatprep.subr.mxu0 0.0
    %1114 = vmatpush1.msra.mxu0 0.0
    %1115 = vmatprep.subr.mxu0 0.0
    %1116 = vmatpush1.msra.mxu0 0.0
    %1117 = vmatprep.subr.mxu0 0.0
    %1118 = vmatpush1.msra.mxu0 0.0
    %1119 = vmatprep.subr.mxu0 0.0
    %1120 = vmatpush1.msra.mxu0 0.0
    %1121 = vmatprep.subr.mxu0 0.0
    %1122 = vmatpush1.msra.mxu0 0.0
    %1123 = vmatprep.subr.mxu0 0.0
    %1124 = vmatpush1.msra.mxu0 0.0
    %1125 = vmatprep.subr.mxu0 0.0
    %1126 = vmatpush1.msra.mxu0 0.0
    %1127 = vmatprep.subr.mxu0 0.0
    %1128 = vmatpush1.msra.mxu0 0.0
    %1129 = vmatprep.subr.mxu0 0.0
    %1130 = vmatpush1.msra.mxu0 0.0
    %1131 = vmatprep.subr.mxu0 0.0
    %1132 = vmatpush1.msra.mxu0 0.0
    %1133 = vmatprep.subr.mxu0 0.0
    %1134 = vmatpush1.msra.mxu0 0.0
    %1135 = vmatprep.subr.mxu0 0.0
    %1136 = vmatpush1.msra.mxu0 0.0
    %1137 = vmatprep.subr.mxu0 0.0
    %1138 = vmatpush1.msra.mxu0 0.0
    %1139 = vmatprep.subr.mxu0 0.0
    %1140 = vmatpush1.msra.mxu0 0.0
    %1141 = vmatprep.subr.mxu0 0.0
    %1142 = vmatpush1.msra.mxu0 0.0
    %1143 = vmatprep.subr.mxu0 0.0
    %1144 = vmatpush1.msra.mxu0 0.0
    %1145 = vmatprep.subr.mxu0 0.0
    %1146 = vmatpush1.msra.mxu0 0.0
    %1147 = vmatprep.subr.mxu0 0.0
    %1148 = vmatpush1.msra.mxu0 0.0
    %1149 = vmatprep.subr.mxu0 0.0
    %1150 = vmatpush1.msra.mxu0 0.0
    %1151 = vmatprep.subr.mxu0 0.0
    %1152 = vmatpush1.msra.mxu0 0.0
    %1153 = vmatprep.subr.mxu0 0.0
    %1154 = vmatpush1.msra.mxu0 0.0
    %1155 = vmatprep.mubr.f32.mxu0 0.0
    %v1156 = vand.u32 %v609, 4294901760
    %1157 = vmatmul.mubr.f32.gmra.mrb[0].mxu0 %v1156
    %v1158 = vpop.f32.mrb[0].mxu0
    %v1159 = vadd.f32 %v1076, %v1158
    %v1160 = vpop.f32.mrb[0].mxu0
    %1161 = vmatprep.mubr.f32.mxu0 0.0
    %v1162 = vand.u32 %v612, 4294901760
    %1163 = vmatmul.mubr.f32.gmra.mrb[0].mxu0 %v1162
    %v1164 = vpop.f32.mrb[0].mxu0
    %v1165 = vadd.f32 %v1082, %v1164
    %v1166 = vpop.f32.mrb[0].mxu0
    %1167 = vdwg.mxu0
    %vm1168 = vcmask 130048
    %v1170 = vsel %vm1168, %v116, 0
    %v1173 = vsel %vm1168, %v117, 0
    %1175 = vmatprep.subr.mxu0 0.0
    %v1176 = vand.u32 %v1159, 4294901760
    %1177 = vmatpush1.msra.mxu0 %v1176
    %1178 = vmatprep.subr.mxu0 0.0
    %v1179 = vand.u32 %v1165, 4294901760
    %1180 = vmatpush1.msra.mxu0 %v1179
    %1181 = vmatprep.subr.mxu0 0.0
    %1182 = vmatpush1.msra.mxu0 0.0
    %1183 = vmatprep.subr.mxu0 0.0
    %1184 = vmatpush1.msra.mxu0 0.0
    %1185 = vmatprep.subr.mxu0 0.0
    %1186 = vmatpush1.msra.mxu0 0.0
    %1187 = vmatprep.subr.mxu0 0.0
    %1188 = vmatpush1.msra.mxu0 0.0
    %1189 = vmatprep.subr.mxu0 0.0
    %1190 = vmatpush1.msra.mxu0 0.0
    %1191 = vmatprep.subr.mxu0 0.0
    %1192 = vmatpush1.msra.mxu0 0.0
    %1193 = vmatprep.subr.mxu0 0.0
    %1194 = vmatpush1.msra.mxu0 0.0
    %1195 = vmatprep.subr.mxu0 0.0
    %1196 = vmatpush1.msra.mxu0 0.0
    %1197 = vmatprep.subr.mxu0 0.0
    %1198 = vmatpush1.msra.mxu0 0.0
    %1199 = vmatprep.subr.mxu0 0.0
    %1200 = vmatpush1.msra.mxu0 0.0
    %1201 = vmatprep.subr.mxu0 0.0
    %1202 = vmatpush1.msra.mxu0 0.0
    %1203 = vmatprep.subr.mxu0 0.0
    %1204 = vmatpush1.msra.mxu0 0.0
    %1205 = vmatprep.subr.mxu0 0.0
    %1206 = vmatpush1.msra.mxu0 0.0
    %1207 = vmatprep.subr.mxu0 0.0
    %1208 = vmatpush1.msra.mxu0 0.0
    %1209 = vmatprep.subr.mxu0 0.0
    %1210 = vmatpush1.msra.mxu0 0.0
    %1211 = vmatprep.subr.mxu0 0.0
    %1212 = vmatpush1.msra.mxu0 0.0
    %1213 = vmatprep.subr.mxu0 0.0
    %1214 = vmatpush1.msra.mxu0 0.0
    %1215 = vmatprep.subr.mxu0 0.0
    %1216 = vmatpush1.msra.mxu0 0.0
    %1217 = vmatprep.subr.mxu0 0.0
    %1218 = vmatpush1.msra.mxu0 0.0
    %1219 = vmatprep.subr.mxu0 0.0
    %1220 = vmatpush1.msra.mxu0 0.0
    %1221 = vmatprep.subr.mxu0 0.0
    %1222 = vmatpush1.msra.mxu0 0.0
    %1223 = vmatprep.subr.mxu0 0.0
    %1224 = vmatpush1.msra.mxu0 0.0
    %1225 = vmatprep.subr.mxu0 0.0
    %1226 = vmatpush1.msra.mxu0 0.0
    %1227 = vmatprep.subr.mxu0 0.0
    %1228 = vmatpush1.msra.mxu0 0.0
    %1229 = vmatprep.subr.mxu0 0.0
    %1230 = vmatpush1.msra.mxu0 0.0
    %1231 = vmatprep.subr.mxu0 0.0
    %1232 = vmatpush1.msra.mxu0 0.0
    %1233 = vmatprep.subr.mxu0 0.0
    %1234 = vmatpush1.msra.mxu0 0.0
    %1235 = vmatprep.subr.mxu0 0.0
    %1236 = vmatpush1.msra.mxu0 0.0
    %1237 = vmatprep.subr.mxu0 0.0
    %1238 = vmatpush1.msra.mxu0 0.0
    %1239 = vmatprep.subr.mxu0 0.0
    %1240 = vmatpush1.msra.mxu0 0.0
    %1241 = vmatprep.mubr.f32.mxu0 0.0
    %v1242 = vand.u32 %v1170, 4294901760
    %v1243 = vsub.f32 %v1170, %v1242
    %v1244 = vand.u32 %v1243, 4294901760
    %v1245 = vsub.f32 %v1243, %v1244
    %v1246 = vand.u32 %v1245, 4294901760
    %1247 = vmatmul.mubr.f32.gmra.mrb[0].mxu0 %v1246
    %v1248 = vpop.f32.mrb[0].mxu0
    %v1249 = vadd.f32 0.0, %v1248
    %v1250 = vpop.f32.mrb[0].mxu0
    %1251 = vmatprep.mubr.f32.mxu0 0.0
    %v1252 = vand.u32 %v1173, 4294901760
    %v1253 = vsub.f32 %v1173, %v1252
    %v1254 = vand.u32 %v1253, 4294901760
    %v1255 = vsub.f32 %v1253, %v1254
    %v1256 = vand.u32 %v1255, 4294901760
    %1257 = vmatmul.mubr.f32.gmra.mrb[0].mxu0 %v1256
    %v1258 = vpop.f32.mrb[0].mxu0
    %v1259 = vadd.f32 0.0, %v1258
    %v1260 = vpop.f32.mrb[0].mxu0
    %1261 = vdwg.mxu0
    %1262 = vmatprep.subr.mxu0 0.0
    %v1263 = vand.u32 %v1159, 4294901760
    %v1264 = vsub.f32 %v1159, %v1263
    %v1265 = vand.u32 %v1264, 4294901760
    %v1266 = vsub.f32 %v1264, %v1265
    %v1267 = vand.u32 %v1266, 4294901760
    %1268 = vmatpush1.msra.mxu0 %v1267
    %1269 = vmatprep.subr.mxu0 0.0
    %v1270 = vand.u32 %v1165, 4294901760
    %v1271 = vsub.f32 %v1165, %v1270
    %v1272 = vand.u32 %v1271, 4294901760
    %v1273 = vsub.f32 %v1271, %v1272
    %v1274 = vand.u32 %v1273, 4294901760
    %1275 = vmatpush1.msra.mxu0 %v1274
    %1276 = vmatprep.subr.mxu0 0.0
    %1277 = vmatpush1.msra.mxu0 0.0
    %1278 = vmatprep.subr.mxu0 0.0
    %1279 = vmatpush1.msra.mxu0 0.0
    %1280 = vmatprep.subr.mxu0 0.0
    %1281 = vmatpush1.msra.mxu0 0.0
    %1282 = vmatprep.subr.mxu0 0.0
    %1283 = vmatpush1.msra.mxu0 0.0
    %1284 = vmatprep.subr.mxu0 0.0
    %1285 = vmatpush1.msra.mxu0 0.0
    %1286 = vmatprep.subr.mxu0 0.0
    %1287 = vmatpush1.msra.mxu0 0.0
    %1288 = vmatprep.subr.mxu0 0.0
    %1289 = vmatpush1.msra.mxu0 0.0
    %1290 = vmatprep.subr.mxu0 0.0
    %1291 = vmatpush1.msra.mxu0 0.0
    %1292 = vmatprep.subr.mxu0 0.0
    %1293 = vmatpush1.msra.mxu0 0.0
    %1294 = vmatprep.subr.mxu0 0.0
    %1295 = vmatpush1.msra.mxu0 0.0
    %1296 = vmatprep.subr.mxu0 0.0
    %1297 = vmatpush1.msra.mxu0 0.0
    %1298 = vmatprep.subr.mxu0 0.0
    %1299 = vmatpush1.msra.mxu0 0.0
    %1300 = vmatprep.subr.mxu0 0.0
    %1301 = vmatpush1.msra.mxu0 0.0
    %1302 = vmatprep.subr.mxu0 0.0
    %1303 = vmatpush1.msra.mxu0 0.0
    %1304 = vmatprep.subr.mxu0 0.0
    %1305 = vmatpush1.msra.mxu0 0.0
    %1306 = vmatprep.subr.mxu0 0.0
    %1307 = vmatpush1.msra.mxu0 0.0
    %1308 = vmatprep.subr.mxu0 0.0
    %1309 = vmatpush1.msra.mxu0 0.0
    %1310 = vmatprep.subr.mxu0 0.0
    %1311 = vmatpush1.msra.mxu0 0.0
    %1312 = vmatprep.subr.mxu0 0.0
    %1313 = vmatpush1.msra.mxu0 0.0
    %1314 = vmatprep.subr.mxu0 0.0
    %1315 = vmatpush1.msra.mxu0 0.0
    %1316 = vmatprep.subr.mxu0 0.0
    %1317 = vmatpush1.msra.mxu0 0.0
    %1318 = vmatprep.subr.mxu0 0.0
    %1319 = vmatpush1.msra.mxu0 0.0
    %1320 = vmatprep.subr.mxu0 0.0
    %1321 = vmatpush1.msra.mxu0 0.0
    %1322 = vmatprep.subr.mxu0 0.0
    %1323 = vmatpush1.msra.mxu0 0.0
    %1324 = vmatprep.subr.mxu0 0.0
    %1325 = vmatpush1.msra.mxu0 0.0
    %1326 = vmatprep.subr.mxu0 0.0
    %1327 = vmatpush1.msra.mxu0 0.0
    %1328 = vmatprep.subr.mxu0 0.0
    %1329 = vmatpush1.msra.mxu0 0.0
    %1330 = vmatprep.subr.mxu0 0.0
    %1331 = vmatpush1.msra.mxu0 0.0
    %1332 = vmatprep.subr.mxu0 0.0
    %1333 = vmatpush1.msra.mxu0 0.0
    %1334 = vmatprep.subr.mxu0 0.0
    %1335 = vmatpush1.msra.mxu0 0.0
    %1336 = vmatprep.mubr.f32.mxu0 0.0
    %v1337 = vand.u32 %v1170, 4294901760
    %1338 = vmatmul.mubr.f32.gmra.mrb[0].mxu0 %v1337
    %v1339 = vpop.f32.mrb[0].mxu0
    %v1340 = vadd.f32 %v1249, %v1339
    %v1341 = vpop.f32.mrb[0].mxu0
    %1342 = vmatprep.mubr.f32.mxu0 0.0
    %v1343 = vand.u32 %v1173, 4294901760
    %1344 = vmatmul.mubr.f32.gmra.mrb[0].mxu0 %v1343
    %v1345 = vpop.f32.mrb[0].mxu0
    %v1346 = vadd.f32 %v1259, %v1345
    %v1347 = vpop.f32.mrb[0].mxu0
    %1348 = vdwg.mxu0
    %1349 = vmatprep.subr.mxu0 0.0
    %v1350 = vand.u32 %v1159, 4294901760
    %v1351 = vsub.f32 %v1159, %v1350
    %1352 = vmatpush1.msra.mxu0 %v1351
    %1353 = vmatprep.subr.mxu0 0.0
    %v1354 = vand.u32 %v1165, 4294901760
    %v1355 = vsub.f32 %v1165, %v1354
    %1356 = vmatpush1.msra.mxu0 %v1355
    %1357 = vmatprep.subr.mxu0 0.0
    %1358 = vmatpush1.msra.mxu0 0.0
    %1359 = vmatprep.subr.mxu0 0.0
    %1360 = vmatpush1.msra.mxu0 0.0
    %1361 = vmatprep.subr.mxu0 0.0
    %1362 = vmatpush1.msra.mxu0 0.0
    %1363 = vmatprep.subr.mxu0 0.0
    %1364 = vmatpush1.msra.mxu0 0.0
    %1365 = vmatprep.subr.mxu0 0.0
    %1366 = vmatpush1.msra.mxu0 0.0
    %1367 = vmatprep.subr.mxu0 0.0
    %1368 = vmatpush1.msra.mxu0 0.0
    %1369 = vmatprep.subr.mxu0 0.0
    %1370 = vmatpush1.msra.mxu0 0.0
    %1371 = vmatprep.subr.mxu0 0.0
    %1372 = vmatpush1.msra.mxu0 0.0
    %1373 = vmatprep.subr.mxu0 0.0
    %1374 = vmatpush1.msra.mxu0 0.0
    %1375 = vmatprep.subr.mxu0 0.0
    %1376 = vmatpush1.msra.mxu0 0.0
    %1377 = vmatprep.subr.mxu0 0.0
    %1378 = vmatpush1.msra.mxu0 0.0
    %1379 = vmatprep.subr.mxu0 0.0
    %1380 = vmatpush1.msra.mxu0 0.0
    %1381 = vmatprep.subr.mxu0 0.0
    %1382 = vmatpush1.msra.mxu0 0.0
    %1383 = vmatprep.subr.mxu0 0.0
    %1384 = vmatpush1.msra.mxu0 0.0
    %1385 = vmatprep.subr.mxu0 0.0
    %1386 = vmatpush1.msra.mxu0 0.0
    %1387 = vmatprep.subr.mxu0 0.0
    %1388 = vmatpush1.msra.mxu0 0.0
    %1389 = vmatprep.subr.mxu0 0.0
    %1390 = vmatpush1.msra.mxu0 0.0
    %1391 = vmatprep.subr.mxu0 0.0
    %1392 = vmatpush1.msra.mxu0 0.0
    %1393 = vmatprep.subr.mxu0 0.0
    %1394 = vmatpush1.msra.mxu0 0.0
    %1395 = vmatprep.subr.mxu0 0.0
    %1396 = vmatpush1.msra.mxu0 0.0
    %1397 = vmatprep.subr.mxu0 0.0
    %1398 = vmatpush1.msra.mxu0 0.0
    %1399 = vmatprep.subr.mxu0 0.0
    %1400 = vmatpush1.msra.mxu0 0.0
    %1401 = vmatprep.subr.mxu0 0.0
    %1402 = vmatpush1.msra.mxu0 0.0
    %1403 = vmatprep.subr.mxu0 0.0
    %1404 = vmatpush1.msra.mxu0 0.0
    %1405 = vmatprep.subr.mxu0 0.0
    %1406 = vmatpush1.msra.mxu0 0.0
    %1407 = vmatprep.subr.mxu0 0.0
    %1408 = vmatpush1.msra.mxu0 0.0
    %1409 = vmatprep.subr.mxu0 0.0
    %1410 = vmatpush1.msra.mxu0 0.0
    %1411 = vmatprep.subr.mxu0 0.0
    %1412 = vmatpush1.msra.mxu0 0.0
    %1413 = vmatprep.subr.mxu0 0.0
    %1414 = vmatpush1.msra.mxu0 0.0
    %1415 = vmatprep.subr.mxu0 0.0
    %1416 = vmatpush1.msra.mxu0 0.0
    %1417 = vmatprep.mubr.f32.mxu0 0.0
    %v1418 = vand.u32 %v1170, 4294901760
    %v1419 = vsub.f32 %v1170, %v1418
    %1420 = vmatmul.mubr.f32.gmra.mrb[0].mxu0 %v1419
    %v1421 = vpop.f32.mrb[0].mxu0
    %v1422 = vadd.f32 %v1340, %v1421
    %v1423 = vpop.f32.mrb[0].mxu0
    %1424 = vmatprep.mubr.f32.mxu0 0.0
    %v1425 = vand.u32 %v1173, 4294901760
    %v1426 = vsub.f32 %v1173, %v1425
    %1427 = vmatmul.mubr.f32.gmra.mrb[0].mxu0 %v1426
    %v1428 = vpop.f32.mrb[0].mxu0
    %v1429 = vadd.f32 %v1346, %v1428
    %v1430 = vpop.f32.mrb[0].mxu0
    %1431 = vdwg.mxu0
    %1432 = vmatprep.subr.mxu0 0.0
    %v1433 = vand.u32 %v1159, 4294901760
    %1434 = vmatpush1.msra.mxu0 %v1433
    %1435 = vmatprep.subr.mxu0 0.0
    %v1436 = vand.u32 %v1165, 4294901760
    %1437 = vmatpush1.msra.mxu0 %v1436
    %1438 = vmatprep.subr.mxu0 0.0
    %1439 = vmatpush1.msra.mxu0 0.0
    %1440 = vmatprep.subr.mxu0 0.0
    %1441 = vmatpush1.msra.mxu0 0.0
    %1442 = vmatprep.subr.mxu0 0.0
    %1443 = vmatpush1.msra.mxu0 0.0
    %1444 = vmatprep.subr.mxu0 0.0
    %1445 = vmatpush1.msra.mxu0 0.0
    %1446 = vmatprep.subr.mxu0 0.0
    %1447 = vmatpush1.msra.mxu0 0.0
    %1448 = vmatprep.subr.mxu0 0.0
    %1449 = vmatpush1.msra.mxu0 0.0
    %1450 = vmatprep.subr.mxu0 0.0
    %1451 = vmatpush1.msra.mxu0 0.0
    %1452 = vmatprep.subr.mxu0 0.0
    %1453 = vmatpush1.msra.mxu0 0.0
    %1454 = vmatprep.subr.mxu0 0.0
    %1455 = vmatpush1.msra.mxu0 0.0
    %1456 = vmatprep.subr.mxu0 0.0
    %1457 = vmatpush1.msra.mxu0 0.0
    %1458 = vmatprep.subr.mxu0 0.0
    %1459 = vmatpush1.msra.mxu0 0.0
    %1460 = vmatprep.subr.mxu0 0.0
    %1461 = vmatpush1.msra.mxu0 0.0
    %1462 = vmatprep.subr.mxu0 0.0
    %1463 = vmatpush1.msra.mxu0 0.0
    %1464 = vmatprep.subr.mxu0 0.0
    %1465 = vmatpush1.msra.mxu0 0.0
    %1466 = vmatprep.subr.mxu0 0.0
    %1467 = vmatpush1.msra.mxu0 0.0
    %1468 = vmatprep.subr.mxu0 0.0
    %1469 = vmatpush1.msra.mxu0 0.0
    %1470 = vmatprep.subr.mxu0 0.0
    %1471 = vmatpush1.msra.mxu0 0.0
    %1472 = vmatprep.subr.mxu0 0.0
    %1473 = vmatpush1.msra.mxu0 0.0
    %1474 = vmatprep.subr.mxu0 0.0
    %1475 = vmatpush1.msra.mxu0 0.0
    %1476 = vmatprep.subr.mxu0 0.0
    %1477 = vmatpush1.msra.mxu0 0.0
    %1478 = vmatprep.subr.mxu0 0.0
    %1479 = vmatpush1.msra.mxu0 0.0
    %1480 = vmatprep.subr.mxu0 0.0
    %1481 = vmatpush1.msra.mxu0 0.0
    %1482 = vmatprep.subr.mxu0 0.0
    %1483 = vmatpush1.msra.mxu0 0.0
    %1484 = vmatprep.subr.mxu0 0.0
    %1485 = vmatpush1.msra.mxu0 0.0
    %1486 = vmatprep.subr.mxu0 0.0
    %1487 = vmatpush1.msra.mxu0 0.0
    %1488 = vmatprep.subr.mxu0 0.0
    %1489 = vmatpush1.msra.mxu0 0.0
    %1490 = vmatprep.subr.mxu0 0.0
    %1491 = vmatpush1.msra.mxu0 0.0
    %1492 = vmatprep.subr.mxu0 0.0
    %1493 = vmatpush1.msra.mxu0 0.0
    %1494 = vmatprep.subr.mxu0 0.0
    %1495 = vmatpush1.msra.mxu0 0.0
    %1496 = vmatprep.subr.mxu0 0.0
    %1497 = vmatpush1.msra.mxu0 0.0
    %1498 = vmatprep.mubr.f32.mxu0 0.0
    %v1499 = vand.u32 %v1170, 4294901760
    %v1500 = vsub.f32 %v1170, %v1499
    %v1501 = vand.u32 %v1500, 4294901760
    %1502 = vmatmul.mubr.f32.gmra.mrb[0].mxu0 %v1501
    %v1503 = vpop.f32.mrb[0].mxu0
    %v1504 = vadd.f32 %v1422, %v1503
    %v1505 = vpop.f32.mrb[0].mxu0
    %1506 = vmatprep.mubr.f32.mxu0 0.0
    %v1507 = vand.u32 %v1173, 4294901760
    %v1508 = vsub.f32 %v1173, %v1507
    %v1509 = vand.u32 %v1508, 4294901760
    %1510 = vmatmul.mubr.f32.gmra.mrb[0].mxu0 %v1509
    %v1511 = vpop.f32.mrb[0].mxu0
    %v1512 = vadd.f32 %v1429, %v1511
    %v1513 = vpop.f32.mrb[0].mxu0
    %1514 = vdwg.mxu0
    %1515 = vmatprep.subr.mxu0 0.0
    %v1516 = vand.u32 %v1159, 4294901760
    %v1517 = vsub.f32 %v1159, %v1516
    %v1518 = vand.u32 %v1517, 4294901760
    %1519 = vmatpush1.msra.mxu0 %v1518
    %1520 = vmatprep.subr.mxu0 0.0
    %v1521 = vand.u32 %v1165, 4294901760
    %v1522 = vsub.f32 %v1165, %v1521
    %v1523 = vand.u32 %v1522, 4294901760
    %1524 = vmatpush1.msra.mxu0 %v1523
    %1525 = vmatprep.subr.mxu0 0.0
    %1526 = vmatpush1.msra.mxu0 0.0
    %1527 = vmatprep.subr.mxu0 0.0
    %1528 = vmatpush1.msra.mxu0 0.0
    %1529 = vmatprep.subr.mxu0 0.0
    %1530 = vmatpush1.msra.mxu0 0.0
    %1531 = vmatprep.subr.mxu0 0.0
    %1532 = vmatpush1.msra.mxu0 0.0
    %1533 = vmatprep.subr.mxu0 0.0
    %1534 = vmatpush1.msra.mxu0 0.0
    %1535 = vmatprep.subr.mxu0 0.0
    %1536 = vmatpush1.msra.mxu0 0.0
    %1537 = vmatprep.subr.mxu0 0.0
    %1538 = vmatpush1.msra.mxu0 0.0
    %1539 = vmatprep.subr.mxu0 0.0
    %1540 = vmatpush1.msra.mxu0 0.0
    %1541 = vmatprep.subr.mxu0 0.0
    %1542 = vmatpush1.msra.mxu0 0.0
    %1543 = vmatprep.subr.mxu0 0.0
    %1544 = vmatpush1.msra.mxu0 0.0
    %1545 = vmatprep.subr.mxu0 0.0
    %1546 = vmatpush1.msra.mxu0 0.0
    %1547 = vmatprep.subr.mxu0 0.0
    %1548 = vmatpush1.msra.mxu0 0.0
    %1549 = vmatprep.subr.mxu0 0.0
    %1550 = vmatpush1.msra.mxu0 0.0
    %1551 = vmatprep.subr.mxu0 0.0
    %1552 = vmatpush1.msra.mxu0 0.0
    %1553 = vmatprep.subr.mxu0 0.0
    %1554 = vmatpush1.msra.mxu0 0.0
    %1555 = vmatprep.subr.mxu0 0.0
    %1556 = vmatpush1.msra.mxu0 0.0
    %1557 = vmatprep.subr.mxu0 0.0
    %1558 = vmatpush1.msra.mxu0 0.0
    %1559 = vmatprep.subr.mxu0 0.0
    %1560 = vmatpush1.msra.mxu0 0.0
    %1561 = vmatprep.subr.mxu0 0.0
    %1562 = vmatpush1.msra.mxu0 0.0
    %1563 = vmatprep.subr.mxu0 0.0
    %1564 = vmatpush1.msra.mxu0 0.0
    %1565 = vmatprep.subr.mxu0 0.0
    %1566 = vmatpush1.msra.mxu0 0.0
    %1567 = vmatprep.subr.mxu0 0.0
    %1568 = vmatpush1.msra.mxu0 0.0
    %1569 = vmatprep.subr.mxu0 0.0
    %1570 = vmatpush1.msra.mxu0 0.0
    %1571 = vmatprep.subr.mxu0 0.0
    %1572 = vmatpush1.msra.mxu0 0.0
    %1573 = vmatprep.subr.mxu0 0.0
    %1574 = vmatpush1.msra.mxu0 0.0
    %1575 = vmatprep.subr.mxu0 0.0
    %1576 = vmatpush1.msra.mxu0 0.0
    %1577 = vmatprep.subr.mxu0 0.0
    %1578 = vmatpush1.msra.mxu0 0.0
    %1579 = vmatprep.subr.mxu0 0.0
    %1580 = vmatpush1.msra.mxu0 0.0
    %1581 = vmatprep.subr.mxu0 0.0
    %1582 = vmatpush1.msra.mxu0 0.0
    %1583 = vmatprep.subr.mxu0 0.0
    %1584 = vmatpush1.msra.mxu0 0.0
    %1585 = vmatprep.mubr.f32.mxu0 0.0
    %v1586 = vand.u32 %v1170, 4294901760
    %1587 = vmatmul.mubr.f32.gmra.mrb[0].mxu0 %v1586
    %v1588 = vpop.f32.mrb[0].mxu0
    %v1589 = vadd.f32 %v1504, %v1588
    %v1590 = vpop.f32.mrb[0].mxu0
    %1591 = vmatprep.mubr.f32.mxu0 0.0
    %v1592 = vand.u32 %v1173, 4294901760
    %1593 = vmatmul.mubr.f32.gmra.mrb[0].mxu0 %v1592
    %v1594 = vpop.f32.mrb[0].mxu0
    %v1595 = vadd.f32 %v1512, %v1594
    %v1596 = vpop.f32.mrb[0].mxu0
    %1597 = vdwg.mxu0
    %1598 = vmatprep.subr.mxu0 0.0
    %v1599 = vand.u32 %v1159, 4294901760
    %1600 = vmatpush1.msra.mxu0 %v1599
    %1601 = vmatprep.subr.mxu0 0.0
    %v1602 = vand.u32 %v1165, 4294901760
    %1603 = vmatpush1.msra.mxu0 %v1602
    %1604 = vmatprep.subr.mxu0 0.0
    %1605 = vmatpush1.msra.mxu0 0.0
    %1606 = vmatprep.subr.mxu0 0.0
    %1607 = vmatpush1.msra.mxu0 0.0
    %1608 = vmatprep.subr.mxu0 0.0
    %1609 = vmatpush1.msra.mxu0 0.0
    %1610 = vmatprep.subr.mxu0 0.0
    %1611 = vmatpush1.msra.mxu0 0.0
    %1612 = vmatprep.subr.mxu0 0.0
    %1613 = vmatpush1.msra.mxu0 0.0
    %1614 = vmatprep.subr.mxu0 0.0
    %1615 = vmatpush1.msra.mxu0 0.0
    %1616 = vmatprep.subr.mxu0 0.0
    %1617 = vmatpush1.msra.mxu0 0.0
    %1618 = vmatprep.subr.mxu0 0.0
    %1619 = vmatpush1.msra.mxu0 0.0
    %1620 = vmatprep.subr.mxu0 0.0
    %1621 = vmatpush1.msra.mxu0 0.0
    %1622 = vmatprep.subr.mxu0 0.0
    %1623 = vmatpush1.msra.mxu0 0.0
    %1624 = vmatprep.subr.mxu0 0.0
    %1625 = vmatpush1.msra.mxu0 0.0
    %1626 = vmatprep.subr.mxu0 0.0
    %1627 = vmatpush1.msra.mxu0 0.0
    %1628 = vmatprep.subr.mxu0 0.0
    %1629 = vmatpush1.msra.mxu0 0.0
    %1630 = vmatprep.subr.mxu0 0.0
    %1631 = vmatpush1.msra.mxu0 0.0
    %1632 = vmatprep.subr.mxu0 0.0
    %1633 = vmatpush1.msra.mxu0 0.0
    %1634 = vmatprep.subr.mxu0 0.0
    %1635 = vmatpush1.msra.mxu0 0.0
    %1636 = vmatprep.subr.mxu0 0.0
    %1637 = vmatpush1.msra.mxu0 0.0
    %1638 = vmatprep.subr.mxu0 0.0
    %1639 = vmatpush1.msra.mxu0 0.0
    %1640 = vmatprep.subr.mxu0 0.0
    %1641 = vmatpush1.msra.mxu0 0.0
    %1642 = vmatprep.subr.mxu0 0.0
    %1643 = vmatpush1.msra.mxu0 0.0
    %1644 = vmatprep.subr.mxu0 0.0
    %1645 = vmatpush1.msra.mxu0 0.0
    %1646 = vmatprep.subr.mxu0 0.0
    %1647 = vmatpush1.msra.mxu0 0.0
    %1648 = vmatprep.subr.mxu0 0.0
    %1649 = vmatpush1.msra.mxu0 0.0
    %1650 = vmatprep.subr.mxu0 0.0
    %1651 = vmatpush1.msra.mxu0 0.0
    %1652 = vmatprep.subr.mxu0 0.0
    %1653 = vmatpush1.msra.mxu0 0.0
    %1654 = vmatprep.subr.mxu0 0.0
    %1655 = vmatpush1.msra.mxu0 0.0
    %1656 = vmatprep.subr.mxu0 0.0
    %1657 = vmatpush1.msra.mxu0 0.0
    %1658 = vmatprep.subr.mxu0 0.0
    %1659 = vmatpush1.msra.mxu0 0.0
    %1660 = vmatprep.subr.mxu0 0.0
    %1661 = vmatpush1.msra.mxu0 0.0
    %1662 = vmatprep.subr.mxu0 0.0
    %1663 = vmatpush1.msra.mxu0 0.0
    %1664 = vmatprep.mubr.f32.mxu0 0.0
    %v1665 = vand.u32 %v1170, 4294901760
    %1666 = vmatmul.mubr.f32.gmra.mrb[0].mxu0 %v1665
    %v1667 = vpop.f32.mrb[0].mxu0
    %v1668 = vadd.f32 %v1589, %v1667
    %v1669 = vpop.f32.mrb[0].mxu0
    %1670 = vmatprep.mubr.f32.mxu0 0.0
    %v1671 = vand.u32 %v1173, 4294901760
    %1672 = vmatmul.mubr.f32.gmra.mrb[0].mxu0 %v1671
    %v1673 = vpop.f32.mrb[0].mxu0
    %v1674 = vadd.f32 %v1595, %v1673
    %v1675 = vpop.f32.mrb[0].mxu0
    %1676 = vdwg.mxu0
    %v1677 = vld [vmem:[%s1] sm:$0xff]
    %v1678 = vld [vmem:[%s1 + $0x8] sm:$0xff]
    %v1679 = vsub.f32 %v1668, %v1677
    %v1680 = vsub.f32 %v1674, %v1678
    %1681 = vst.msk [vmem:[#allocation5] sm:$0xff] %vm607, %v1679
    %1682 = vst.msk [vmem:[#allocation5 + $0x8] sm:$0xff] %vm607, %v1680
    %v1683 = vmul.f32 %v1679, %v1679
    %v1684 = vmul.f32 %v1680, %v1680
    %v1685 = vsel %vm607, %v1683, 0.0
    %v1686 = vsel %vm607, %v1684, 0.0
    %v1687 = vadd.f32 %v1685, %v1686
    %1688 = vadd.xlane.f32.xlu0 %v1687
    %v1689 = vpop.xlane.xlu0 %1688
    %v1690 = vrot.slane %v1689, 4
    %v1691 = vadd.f32 %v1689, %v1690
    %v1692 = vrot.slane %v1691, 2
    %v1693 = vadd.f32 %v1691, %v1692
    %v1694 = vrot.slane %v1693, 1
    %v1695 = vadd.f32 %v1693, %v1694
    %s1696 = vtos %v1695
    %s1697 = smul.f32 %s1696, 0.0013020834
    %s1698 = scalar_lea.smem [#allocation2], 0
    %1699 = sst [smem:[%s1698]] %s1697
    // Predicated region
    $region10: #{_tone_loss_core.1} parent=1 // pred_check
      _
    $region11: #{_tone_loss_core.1} parent=1 // pred_check_branch
      %1701 = sbr.rel (0) target = $region13
    $region12: #{_tone_loss_core.1} parent=1 // pred_region
      %s1703 = ssub.s32 16, 16
      %1704 = vsyncadd [#allocation4], %s1703
      %1707 = dma.smem_to_hbm [#allocation2], 16, %s2, [#allocation4]
    $region13: #{_tone_loss_core.1} parent=1 // pred_fallthru
      _
    // Predicated region
    $region14: #{_tone_loss_core.1} parent=1 // pred_check
      _
    $region15: #{_tone_loss_core.1} parent=1 // pred_check_branch
      %1709 = sbr.rel (0) target = $region17
    $region16: #{_tone_loss_core.1} parent=1 // pred_region
      %s1711 = ssub.s32 256, 256
      %1712 = vsyncadd [#allocation3], %s1711
      %s1713 = sshll.u32 [#allocation5], 4
      %s1714 = int_to_ptr.vmem [resolvable:$true] %s1713
      %1719 = dma.vmem_to_hbm [thread:$0]  %s1714, 256, %s3, [#allocation3], 128, 128, 8
    $region17: #{_tone_loss_core.1} parent=1 // pred_fallthru
      _
    // Predicated region
    $region18: #{_tone_loss_core.1} parent=1 // pred_check
      _
    $region19: #{_tone_loss_core.1} parent=1 // pred_check_branch
      %1721 = sbr.rel (0) target = $region21
    $region20: #{_tone_loss_core.1} parent=1 // pred_region
      %1722 = dma.done [#allocation4], 16
    $region21: #{_tone_loss_core.1} parent=1 // pred_fallthru
      _
    // Predicated region
    $region22: #{_tone_loss_core.1} parent=1 // pred_check
      _
    $region23: #{_tone_loss_core.1} parent=1 // pred_check_branch
      %1724 = sbr.rel (0) target = $region25
    $region24: #{_tone_loss_core.1} parent=1 // pred_region
      %1725 = dma.done [#allocation3], 256
    $region25: #{_tone_loss_core.1} parent=1 // pred_fallthru
      _
    %1726 = sfence
    %1727 = vsyncpa [#allocation3], 1
    %1728 = vsyncpa [#allocation4], 1

</llo_original>
